<compile_context>
chip_gen: v7x
topology: tpu7x:2x2x1
jax: 0.10.0
libtpu: 0.0.40
codegen_flags: <defaults>
</compile_context>

<pallas_src>
import jax
import jax.numpy as jnp
from jax.experimental import pallas as pl
from jax.experimental.pallas import tpu as pltpu

KSIZE = 7
PAD = 3

# Fixed Gaussian kernel from the module's __init__ (compile-time constants).
_GAUSS7 = (
    (0.0002, 0.001, 0.003, 0.0043, 0.003, 0.001, 0.0002),
    (0.001, 0.0062, 0.0186, 0.0269, 0.0186, 0.0062, 0.001),
    (0.003, 0.0186, 0.0561, 0.081, 0.0561, 0.0186, 0.003),
    (0.0043, 0.0269, 0.081, 0.1169, 0.081, 0.0269, 0.0043),
    (0.003, 0.0186, 0.0561, 0.081, 0.0561, 0.0186, 0.003),
    (0.001, 0.0062, 0.0186, 0.0269, 0.0186, 0.0062, 0.001),
    (0.0002, 0.001, 0.003, 0.0043, 0.003, 0.001, 0.0002),
)


def _weight_groups():
    """Group the 49 taps by (exact) weight value.

    The table has full D4 symmetry, so the 49 taps collapse onto 10 distinct
    weights: sum the equally-weighted shifted slices first, multiply once.
    """
    groups = {}
    for di in range(KSIZE):
        for dj in range(KSIZE):
            groups.setdefault(_GAUSS7[di][dj], []).append((di, dj))
    return tuple((wt, tuple(taps)) for wt, taps in groups.items())


_WGROUPS = _weight_groups()

_ACC_STRIP_F32 = 4096            # ~4 vregs for a single-group strip accumulator
_ACC_BLOCK_F32 = 8192            # ~8 vregs for the full strip accumulator
_MAX_STRIPS = 32                 # bound trace-time unrolling for tall images
_VMEM_BUDGET = 8 * 1024 * 1024   # conservative across v5e/v6e/v7x scoped limits


def _make_blur_kernel(tb_g: int, kpack: int, h: int, w: int, rs: int):
    hp = h + 2 * PAD
    wp = w + 2 * PAD
    w_pack = kpack * wp                 # scratch lane width (gutter layout)
    w_acc = (kpack - 1) * wp + w        # accumulator lane width
    n_strips = -(-h // rs)

    def kernel(x_ref, o_ref, xp_ref):
        # ---- stage input into the padded scratch (zero halo, packed lanes) --
        # Top/bottom 3-row halos: two wide stores per step.  Re-zeroing every
        # step (rather than once under pl.when) keeps each grid step
        # self-contained, so "parallel" semantics stay correct when the grid
        # is split across TensorCores (v7x).
        xp_ref[:, :PAD, :] = jnp.zeros((tb_g, PAD, w_pack), jnp.float32)
        xp_ref[:, PAD + h:, :] = jnp.zeros((tb_g, PAD, w_pack), jnp.float32)
        # Each plane is stored together with its 3-lane left/right zero
        # gutters in one wp-wide store, so the column gutters are re-zeroed
        # for free (no extra store instructions vs. storing just the centre).
        zcol = jnp.zeros((h, PAD), jnp.float32)
        for g in range(tb_g):
            for k in range(kpack):
                plane = x_ref[g * kpack + k].astype(jnp.float32)       # (h, w)
                band = jnp.concatenate([zcol, plane, zcol], axis=-1)   # (h, wp)
                xp_ref[g, PAD:PAD + h, k * wp:(k + 1) * wp] = band

        # ---- strip-mined, symmetry-folded 49-tap accumulation ---------------
        # acc (tb_g, rows, w_acc) stays in vregs across all taps of a strip;
        # every tap reads the scratch ref directly (no materialized slab).
        for s in range(n_strips):
            r0 = s * rs
            rows = min(rs, h - r0)
            acc = jnp.zeros((tb_g, rows, w_acc), jnp.float32)
            for wt, taps in _WGROUPS:
                part = None
                for di, dj in taps:
                    sl = xp_ref[:, r0 + di:r0 + di + rows, dj:dj + w_acc]
                    part = sl if part is None else part + sl
                acc = acc + wt * part
            # Repack to the lane-dense output layout (drop the gutters).
            if kpack == 1:
                out = acc
            else:
                out = jnp.concatenate(
                    [acc[:, :, k * wp:k * wp + w] for k in range(kpack)],
                    axis=-1)                                 # (tb_g, rows, kpack*w)
            o_ref[:, r0:r0 + rows, :] = out.astype(o_ref.dtype)

    return kernel


def _plan(n: int, h: int, w: int, itemsize: int):
    """Pick (kpack, tb_g, rs, n_blocks) for the given problem size."""
    # Lane packing factor: make the packed output width >= ~128 lanes so the
    # output store is a wide (unmasked) vst — the biggest lever when w < 128.
    kpack = 1 if w >= 128 else max(1, min(-(-128 // w), 16, n))
    wp = w + 2 * PAD
    hp = h + 2 * PAD
    w_acc = (kpack - 1) * wp + w
    n_g = -(-n // kpack)                       # plane groups

    # Rows per strip: as tall as possible while one group's strip accumulator
    # stays a few vregs; multiple of 8 (sublane tile) unless it covers all h.
    rs_cap = max(8, (_ACC_STRIP_F32 // w_acc) // 8 * 8)
    rs = h if h <= rs_cap else rs_cap
    if -(-h // rs) > _MAX_STRIPS:              # bound unrolled code size
        rs = ((-(-h // _MAX_STRIPS) + 7) // 8) * 8

    # Groups per grid step: keep the live accumulator ~<= 8 vregs, stay well
    # inside scoped VMEM on every generation (v5e 16 MiB / v6e 32 MiB / v7x
    # 32 MiB scoped, 64 MiB physical), and leave >= 2 grid steps when possible
    # so a v7x chip (2 TensorCores) can split the "parallel" axis.
    tb_g = max(1, min(n_g, _ACC_BLOCK_F32 // (rs * w_acc)))
    per_group = (2 * kpack * h * w * itemsize          # input block, double-buffered
                 + 2 * h * kpack * w * itemsize        # packed output block, dbl-buffered
                 + hp * kpack * wp * 4)                # padded f32 scratch
    tb_g = max(1, min(tb_g, _VMEM_BUDGET // max(per_group, 1)))
    if n_g >= 2:
        tb_g = min(tb_g, -(-n_g // 2))

    n_blocks = -(-n_g // tb_g)
    return kpack, tb_g, rs, n_blocks


def gaussian_blur7(x: jax.Array) -> jax.Array:
    """x: (b, c, h, w) -> (b, c, h, w), 7x7 Gaussian blur (zero padding = 3)."""
    b, c, h, w = x.shape
    n = b * c
    x_flat = x.reshape(n, h, w)

    kpack, tb_g, rs, n_blocks = _plan(n, h, w, x.dtype.itemsize)
    tb = tb_g * kpack
    hp, wp = h + 2 * PAD, w + 2 * PAD
    n_groups = n_blocks * tb_g

    out_packed = pl.pallas_call(
        _make_blur_kernel(tb_g, kpack, h, w, rs),
        out_shape=jax.ShapeDtypeStruct((n_groups, h, kpack * w), x.dtype),
        grid_spec=pltpu.PrefetchScalarGridSpec(
            num_scalar_prefetch=0,
            grid=(n_blocks,),
            in_specs=[pl.BlockSpec((tb, h, w), lambda i: (i, 0, 0))],
            out_specs=pl.BlockSpec((tb_g, h, kpack * w), lambda i: (i, 0, 0)),
            scratch_shapes=[
                pltpu.VMEM((tb_g, hp, kpack * wp), jnp.float32),
            ],
        ),
        compiler_params=pltpu.CompilerParams(
            dimension_semantics=("parallel",),
            vmem_limit_bytes=32 * 1024 * 1024,   # safe on v7x (64 MiB physical)
        ),
    )(x_flat)

    # Un-pack the lane-packed planes.  When kpack == 1 the transpose only
    # moves a size-1 axis (free); otherwise it is one XLA pass over the output.
    out = out_packed.reshape(n_groups, h, kpack, w)
    out = out.transpose(0, 2, 1, 3).reshape(n_groups * kpack, h, w)
    return out[:n].reshape(b, c, h, w)


def _reference_blur(x):
    """Pure-JAX reference (same semantics as F.conv2d with padding=3)."""
    b, c, h, w = x.shape
    weight = jnp.asarray(_GAUSS7, dtype=jnp.float32)[None, None]  # (1,1,7,7)
    x1 = x.reshape(b * c, 1, h, w).astype(jnp.float32)
    y = jax.lax.conv_general_dilated(
        x1, weight, window_strides=(1, 1),
        padding=((PAD, PAD), (PAD, PAD)),
        dimension_numbers=("NCHW", "OIHW", "NCHW"))
    return y.reshape(b, c, h, w)


if __name__ == "__main__":
    key = jax.random.PRNGKey(0)
    b, c, h, w = 2, 4, 16, 16
    x = jax.random.normal(key, (b, c, h, w), dtype=jnp.float32)

    y = jax.block_until_ready(gaussian_blur7(x))

    y_ref = _reference_blur(x)
    assert y.shape == (b, c, h, w)
    assert jnp.allclose(y, y_ref, atol=1e-5, rtol=1e-5), "mismatch vs reference"

    print("KERNEL_OK")
</pallas_src>

<mosaic_0001>
module attributes {stable_mosaic.version = 11 : i64} {
  func.func @kernel(%arg0: i32, %arg1: memref<8x16x16xf32, #tpu.memory_space<vmem>>, %arg2: memref<1x16x128xf32, #tpu.memory_space<vmem>>, %arg3: memref<1x22x176xf32, #tpu.memory_space<vmem>>) attributes {dimension_semantics = [#tpu.dimension_semantics<parallel>], iteration_bounds = array<i64: 1>, scalar_prefetch = 0 : i64, scratch_operands = 1 : i64, tpu.core_type = #tpu.core_type<tc>, window_params = [{transform_indices = @transform_0, window_bounds = array<i64: 8, 16, 16>}, {transform_indices = @transform_1, window_bounds = array<i64: 1, 16, 128>}]} {
    %cst = arith.constant 0.000000e+00 : f32
    %0 = vector.broadcast %cst : f32 to vector<1x3x176xf32>
    %c0 = arith.constant 0 : index
    %c0_0 = arith.constant 0 : index
    %c0_1 = arith.constant 0 : index
    %1 = vector.load %arg3[%c0, %c0_0, %c0_1] : memref<1x22x176xf32, #tpu.memory_space<vmem>>, vector<1x3x176xf32>
    tpu.vector_store %arg3[%c0, %c0_0, %c0_1], %0 {strides = array<i32>} : memref<1x22x176xf32, #tpu.memory_space<vmem>>, vector<1x3x176xf32>,
    %cst_2 = arith.constant 0.000000e+00 : f32
    %2 = vector.broadcast %cst_2 : f32 to vector<1x3x176xf32>
    %c0_3 = arith.constant 0 : index
    %c19 = arith.constant 19 : index
    %c0_4 = arith.constant 0 : index
    %3 = vector.load %arg3[%c0_3, %c19, %c0_4] : memref<1x22x176xf32, #tpu.memory_space<vmem>>, vector<1x3x176xf32>
    tpu.vector_store %arg3[%c0_3, %c19, %c0_4], %2 {strides = array<i32>} : memref<1x22x176xf32, #tpu.memory_space<vmem>>, vector<1x3x176xf32>,
    %cst_5 = arith.constant 0.000000e+00 : f32
    %4 = vector.broadcast %cst_5 : f32 to vector<16x3xf32>
    %c0_6 = arith.constant 0 : index
    %c0_7 = arith.constant 0 : index
    %c0_8 = arith.constant 0 : index
    %5 = vector.load %arg1[%c0_6, %c0_7, %c0_8] : memref<8x16x16xf32, #tpu.memory_space<vmem>>, vector<1x16x16xf32>
    %6 = vector.shape_cast %5 : vector<1x16x16xf32> to vector<16x16xf32>
    %7 = tpu.concatenate %4, %6, %4 in 1 : vector<16x3xf32>, vector<16x16xf32>, vector<16x3xf32> -> vector<16x22xf32>
    %c0_9 = arith.constant 0 : index
    %c3 = arith.constant 3 : index
    %c0_10 = arith.constant 0 : index
    %8 = vector.load %arg3[%c0_9, %c3, %c0_10] : memref<1x22x176xf32, #tpu.memory_space<vmem>>, vector<1x16x22xf32>
    %9 = vector.shape_cast %8 : vector<1x16x22xf32> to vector<16x22xf32>
    %10 = vector.shape_cast %7 : vector<16x22xf32> to vector<1x16x22xf32>
    tpu.vector_store %arg3[%c0_9, %c3, %c0_10], %10 {strides = array<i32>} : memref<1x22x176xf32, #tpu.memory_space<vmem>>, vector<1x16x22xf32>,
    %c1 = arith.constant 1 : index
    %c0_11 = arith.constant 0 : index
    %c0_12 = arith.constant 0 : index
    %11 = vector.load %arg1[%c1, %c0_11, %c0_12] : memref<8x16x16xf32, #tpu.memory_space<vmem>>, vector<1x16x16xf32>
    %12 = vector.shape_cast %11 : vector<1x16x16xf32> to vector<16x16xf32>
    %13 = tpu.concatenate %4, %12, %4 in 1 : vector<16x3xf32>, vector<16x16xf32>, vector<16x3xf32> -> vector<16x22xf32>
    %c0_13 = arith.constant 0 : index
    %c3_14 = arith.constant 3 : index
    %c22 = arith.constant 22 : index
    %14 = vector.load %arg3[%c0_13, %c3_14, %c22] : memref<1x22x176xf32, #tpu.memory_space<vmem>>, vector<1x16x22xf32>
    %15 = vector.shape_cast %14 : vector<1x16x22xf32> to vector<16x22xf32>
    %16 = vector.shape_cast %13 : vector<16x22xf32> to vector<1x16x22xf32>
    tpu.vector_store %arg3[%c0_13, %c3_14, %c22], %16 {strides = array<i32>} : memref<1x22x176xf32, #tpu.memory_space<vmem>>, vector<1x16x22xf32>,
    %c2 = arith.constant 2 : index
    %c0_15 = arith.constant 0 : index
    %c0_16 = arith.constant 0 : index
    %17 = vector.load %arg1[%c2, %c0_15, %c0_16] : memref<8x16x16xf32, #tpu.memory_space<vmem>>, vector<1x16x16xf32>
    %18 = vector.shape_cast %17 : vector<1x16x16xf32> to vector<16x16xf32>
    %19 = tpu.concatenate %4, %18, %4 in 1 : vector<16x3xf32>, vector<16x16xf32>, vector<16x3xf32> -> vector<16x22xf32>
    %c0_17 = arith.constant 0 : index
    %c3_18 = arith.constant 3 : index
    %c44 = arith.constant 44 : index
    %20 = vector.load %arg3[%c0_17, %c3_18, %c44] : memref<1x22x176xf32, #tpu.memory_space<vmem>>, vector<1x16x22xf32>
    %21 = vector.shape_cast %20 : vector<1x16x22xf32> to vector<16x22xf32>
    %22 = vector.shape_cast %19 : vector<16x22xf32> to vector<1x16x22xf32>
    tpu.vector_store %arg3[%c0_17, %c3_18, %c44], %22 {strides = array<i32>} : memref<1x22x176xf32, #tpu.memory_space<vmem>>, vector<1x16x22xf32>,
    %c3_19 = arith.constant 3 : index
    %c0_20 = arith.constant 0 : index
    %c0_21 = arith.constant 0 : index
    %23 = vector.load %arg1[%c3_19, %c0_20, %c0_21] : memref<8x16x16xf32, #tpu.memory_space<vmem>>, vector<1x16x16xf32>
    %24 = vector.shape_cast %23 : vector<1x16x16xf32> to vector<16x16xf32>
    %25 = tpu.concatenate %4, %24, %4 in 1 : vector<16x3xf32>, vector<16x16xf32>, vector<16x3xf32> -> vector<16x22xf32>
    %c0_22 = arith.constant 0 : index
    %c3_23 = arith.constant 3 : index
    %c66 = arith.constant 66 : index
    %26 = vector.load %arg3[%c0_22, %c3_23, %c66] : memref<1x22x176xf32, #tpu.memory_space<vmem>>, vector<1x16x22xf32>
    %27 = vector.shape_cast %26 : vector<1x16x22xf32> to vector<16x22xf32>
    %28 = vector.shape_cast %25 : vector<16x22xf32> to vector<1x16x22xf32>
    tpu.vector_store %arg3[%c0_22, %c3_23, %c66], %28 {strides = array<i32>} : memref<1x22x176xf32, #tpu.memory_space<vmem>>, vector<1x16x22xf32>,
    %c4 = arith.constant 4 : index
    %c0_24 = arith.constant 0 : index
    %c0_25 = arith.constant 0 : index
    %29 = vector.load %arg1[%c4, %c0_24, %c0_25] : memref<8x16x16xf32, #tpu.memory_space<vmem>>, vector<1x16x16xf32>
    %30 = vector.shape_cast %29 : vector<1x16x16xf32> to vector<16x16xf32>
    %31 = tpu.concatenate %4, %30, %4 in 1 : vector<16x3xf32>, vector<16x16xf32>, vector<16x3xf32> -> vector<16x22xf32>
    %c0_26 = arith.constant 0 : index
    %c3_27 = arith.constant 3 : index
    %c88 = arith.constant 88 : index
    %32 = vector.load %arg3[%c0_26, %c3_27, %c88] : memref<1x22x176xf32, #tpu.memory_space<vmem>>, vector<1x16x22xf32>
    %33 = vector.shape_cast %32 : vector<1x16x22xf32> to vector<16x22xf32>
    %34 = vector.shape_cast %31 : vector<16x22xf32> to vector<1x16x22xf32>
    tpu.vector_store %arg3[%c0_26, %c3_27, %c88], %34 {strides = array<i32>} : memref<1x22x176xf32, #tpu.memory_space<vmem>>, vector<1x16x22xf32>,
    %c5 = arith.constant 5 : index
    %c0_28 = arith.constant 0 : index
    %c0_29 = arith.constant 0 : index
    %35 = vector.load %arg1[%c5, %c0_28, %c0_29] : memref<8x16x16xf32, #tpu.memory_space<vmem>>, vector<1x16x16xf32>
    %36 = vector.shape_cast %35 : vector<1x16x16xf32> to vector<16x16xf32>
    %37 = tpu.concatenate %4, %36, %4 in 1 : vector<16x3xf32>, vector<16x16xf32>, vector<16x3xf32> -> vector<16x22xf32>
    %c0_30 = arith.constant 0 : index
    %c3_31 = arith.constant 3 : index
    %c110 = arith.constant 110 : index
    %38 = vector.load %arg3[%c0_30, %c3_31, %c110] : memref<1x22x176xf32, #tpu.memory_space<vmem>>, vector<1x16x22xf32>
    %39 = vector.shape_cast %38 : vector<1x16x22xf32> to vector<16x22xf32>
    %40 = vector.shape_cast %37 : vector<16x22xf32> to vector<1x16x22xf32>
    tpu.vector_store %arg3[%c0_30, %c3_31, %c110], %40 {strides = array<i32>} : memref<1x22x176xf32, #tpu.memory_space<vmem>>, vector<1x16x22xf32>,
    %c6 = arith.constant 6 : index
    %c0_32 = arith.constant 0 : index
    %c0_33 = arith.constant 0 : index
    %41 = vector.load %arg1[%c6, %c0_32, %c0_33] : memref<8x16x16xf32, #tpu.memory_space<vmem>>, vector<1x16x16xf32>
    %42 = vector.shape_cast %41 : vector<1x16x16xf32> to vector<16x16xf32>
    %43 = tpu.concatenate %4, %42, %4 in 1 : vector<16x3xf32>, vector<16x16xf32>, vector<16x3xf32> -> vector<16x22xf32>
    %c0_34 = arith.constant 0 : index
    %c3_35 = arith.constant 3 : index
    %c132 = arith.constant 132 : index
    %44 = vector.load %arg3[%c0_34, %c3_35, %c132] : memref<1x22x176xf32, #tpu.memory_space<vmem>>, vector<1x16x22xf32>
    %45 = vector.shape_cast %44 : vector<1x16x22xf32> to vector<16x22xf32>
    %46 = vector.shape_cast %43 : vector<16x22xf32> to vector<1x16x22xf32>
    tpu.vector_store %arg3[%c0_34, %c3_35, %c132], %46 {strides = array<i32>} : memref<1x22x176xf32, #tpu.memory_space<vmem>>, vector<1x16x22xf32>,
    %c7 = arith.constant 7 : index
    %c0_36 = arith.constant 0 : index
    %c0_37 = arith.constant 0 : index
    %47 = vector.load %arg1[%c7, %c0_36, %c0_37] : memref<8x16x16xf32, #tpu.memory_space<vmem>>, vector<1x16x16xf32>
    %48 = vector.shape_cast %47 : vector<1x16x16xf32> to vector<16x16xf32>
    %49 = tpu.concatenate %4, %48, %4 in 1 : vector<16x3xf32>, vector<16x16xf32>, vector<16x3xf32> -> vector<16x22xf32>
    %c0_38 = arith.constant 0 : index
    %c3_39 = arith.constant 3 : index
    %c154 = arith.constant 154 : index
    %50 = vector.load %arg3[%c0_38, %c3_39, %c154] : memref<1x22x176xf32, #tpu.memory_space<vmem>>, vector<1x16x22xf32>
    %51 = vector.shape_cast %50 : vector<1x16x22xf32> to vector<16x22xf32>
    %52 = vector.shape_cast %49 : vector<16x22xf32> to vector<1x16x22xf32>
    tpu.vector_store %arg3[%c0_38, %c3_39, %c154], %52 {strides = array<i32>} : memref<1x22x176xf32, #tpu.memory_space<vmem>>, vector<1x16x22xf32>,
    %cst_40 = arith.constant 0.000000e+00 : f32
    %53 = vector.broadcast %cst_40 : f32 to vector<1x16x170xf32>
    %c0_41 = arith.constant 0 : index
    %c0_42 = arith.constant 0 : index
    %c0_43 = arith.constant 0 : index
    %54 = vector.load %arg3[%c0_41, %c0_42, %c0_43] : memref<1x22x176xf32, #tpu.memory_space<vmem>>, vector<1x16x170xf32>
    %c0_44 = arith.constant 0 : index
    %c0_45 = arith.constant 0 : index
    %c6_46 = arith.constant 6 : index
    %55 = vector.load %arg3[%c0_44, %c0_45, %c6_46] : memref<1x22x176xf32, #tpu.memory_space<vmem>>, vector<1x16x170xf32>
    %56 = arith.addf %54, %55 : vector<1x16x170xf32>
    %c0_47 = arith.constant 0 : index
    %c6_48 = arith.constant 6 : index
    %c0_49 = arith.constant 0 : index
    %57 = vector.load %arg3[%c0_47, %c6_48, %c0_49] : memref<1x22x176xf32, #tpu.memory_space<vmem>>, vector<1x16x170xf32>
    %58 = arith.addf %56, %57 : vector<1x16x170xf32>
    %c0_50 = arith.constant 0 : index
    %c6_51 = arith.constant 6 : index
    %c6_52 = arith.constant 6 : index
    %59 = vector.load %arg3[%c0_50, %c6_51, %c6_52] : memref<1x22x176xf32, #tpu.memory_space<vmem>>, vector<1x16x170xf32>
    %60 = arith.addf %58, %59 : vector<1x16x170xf32>
    %cst_53 = arith.constant 2.000000e-04 : f32
    %61 = vector.broadcast %cst_53 : f32 to vector<1x16x170xf32>
    %62 = arith.mulf %61, %60 : vector<1x16x170xf32>
    %63 = arith.addf %53, %62 : vector<1x16x170xf32>
    %c0_54 = arith.constant 0 : index
    %c0_55 = arith.constant 0 : index
    %c1_56 = arith.constant 1 : index
    %64 = vector.load %arg3[%c0_54, %c0_55, %c1_56] : memref<1x22x176xf32, #tpu.memory_space<vmem>>, vector<1x16x170xf32>
    %c0_57 = arith.constant 0 : index
    %c0_58 = arith.constant 0 : index
    %c5_59 = arith.constant 5 : index
    %65 = vector.load %arg3[%c0_57, %c0_58, %c5_59] : memref<1x22x176xf32, #tpu.memory_space<vmem>>, vector<1x16x170xf32>
    %66 = arith.addf %64, %65 : vector<1x16x170xf32>
    %c0_60 = arith.constant 0 : index
    %c1_61 = arith.constant 1 : index
    %c0_62 = arith.constant 0 : index
    %67 = vector.load %arg3[%c0_60, %c1_61, %c0_62] : memref<1x22x176xf32, #tpu.memory_space<vmem>>, vector<1x16x170xf32>
    %68 = arith.addf %66, %67 : vector<1x16x170xf32>
    %c0_63 = arith.constant 0 : index
    %c1_64 = arith.constant 1 : index
    %c6_65 = arith.constant 6 : index
    %69 = vector.load %arg3[%c0_63, %c1_64, %c6_65] : memref<1x22x176xf32, #tpu.memory_space<vmem>>, vector<1x16x170xf32>
    %70 = arith.addf %68, %69 : vector<1x16x170xf32>
    %c0_66 = arith.constant 0 : index
    %c5_67 = arith.constant 5 : index
    %c0_68 = arith.constant 0 : index
    %71 = vector.load %arg3[%c0_66, %c5_67, %c0_68] : memref<1x22x176xf32, #tpu.memory_space<vmem>>, vector<1x16x170xf32>
    %72 = arith.addf %70, %71 : vector<1x16x170xf32>
    %c0_69 = arith.constant 0 : index
    %c5_70 = arith.constant 5 : index
    %c6_71 = arith.constant 6 : index
    %73 = vector.load %arg3[%c0_69, %c5_70, %c6_71] : memref<1x22x176xf32, #tpu.memory_space<vmem>>, vector<1x16x170xf32>
    %74 = arith.addf %72, %73 : vector<1x16x170xf32>
    %c0_72 = arith.constant 0 : index
    %c6_73 = arith.constant 6 : index
    %c1_74 = arith.constant 1 : index
    %75 = vector.load %arg3[%c0_72, %c6_73, %c1_74] : memref<1x22x176xf32, #tpu.memory_space<vmem>>, vector<1x16x170xf32>
    %76 = arith.addf %74, %75 : vector<1x16x170xf32>
    %c0_75 = arith.constant 0 : index
    %c6_76 = arith.constant 6 : index
    %c5_77 = arith.constant 5 : index
    %77 = vector.load %arg3[%c0_75, %c6_76, %c5_77] : memref<1x22x176xf32, #tpu.memory_space<vmem>>, vector<1x16x170xf32>
    %78 = arith.addf %76, %77 : vector<1x16x170xf32>
    %cst_78 = arith.constant 1.000000e-03 : f32
    %79 = vector.broadcast %cst_78 : f32 to vector<1x16x170xf32>
    %80 = arith.mulf %79, %78 : vector<1x16x170xf32>
    %81 = arith.addf %63, %80 : vector<1x16x170xf32>
    %c0_79 = arith.constant 0 : index
    %c0_80 = arith.constant 0 : index
    %c2_81 = arith.constant 2 : index
    %82 = vector.load %arg3[%c0_79, %c0_80, %c2_81] : memref<1x22x176xf32, #tpu.memory_space<vmem>>, vector<1x16x170xf32>
    %c0_82 = arith.constant 0 : index
    %c0_83 = arith.constant 0 : index
    %c4_84 = arith.constant 4 : index
    %83 = vector.load %arg3[%c0_82, %c0_83, %c4_84] : memref<1x22x176xf32, #tpu.memory_space<vmem>>, vector<1x16x170xf32>
    %84 = arith.addf %82, %83 : vector<1x16x170xf32>
    %c0_85 = arith.constant 0 : index
    %c2_86 = arith.constant 2 : index
    %c0_87 = arith.constant 0 : index
    %85 = vector.load %arg3[%c0_85, %c2_86, %c0_87] : memref<1x22x176xf32, #tpu.memory_space<vmem>>, vector<1x16x170xf32>
    %86 = arith.addf %84, %85 : vector<1x16x170xf32>
    %c0_88 = arith.constant 0 : index
    %c2_89 = arith.constant 2 : index
    %c6_90 = arith.constant 6 : index
    %87 = vector.load %arg3[%c0_88, %c2_89, %c6_90] : memref<1x22x176xf32, #tpu.memory_space<vmem>>, vector<1x16x170xf32>
    %88 = arith.addf %86, %87 : vector<1x16x170xf32>
    %c0_91 = arith.constant 0 : index
    %c4_92 = arith.constant 4 : index
    %c0_93 = arith.constant 0 : index
    %89 = vector.load %arg3[%c0_91, %c4_92, %c0_93] : memref<1x22x176xf32, #tpu.memory_space<vmem>>, vector<1x16x170xf32>
    %90 = arith.addf %88, %89 : vector<1x16x170xf32>
    %c0_94 = arith.constant 0 : index
    %c4_95 = arith.constant 4 : index
    %c6_96 = arith.constant 6 : index
    %91 = vector.load %arg3[%c0_94, %c4_95, %c6_96] : memref<1x22x176xf32, #tpu.memory_space<vmem>>, vector<1x16x170xf32>
    %92 = arith.addf %90, %91 : vector<1x16x170xf32>
    %c0_97 = arith.constant 0 : index
    %c6_98 = arith.constant 6 : index
    %c2_99 = arith.constant 2 : index
    %93 = vector.load %arg3[%c0_97, %c6_98, %c2_99] : memref<1x22x176xf32, #tpu.memory_space<vmem>>, vector<1x16x170xf32>
    %94 = arith.addf %92, %93 : vector<1x16x170xf32>
    %c0_100 = arith.constant 0 : index
    %c6_101 = arith.constant 6 : index
    %c4_102 = arith.constant 4 : index
    %95 = vector.load %arg3[%c0_100, %c6_101, %c4_102] : memref<1x22x176xf32, #tpu.memory_space<vmem>>, vector<1x16x170xf32>
    %96 = arith.addf %94, %95 : vector<1x16x170xf32>
    %cst_103 = arith.constant 3.000000e-03 : f32
    %97 = vector.broadcast %cst_103 : f32 to vector<1x16x170xf32>
    %98 = arith.mulf %97, %96 : vector<1x16x170xf32>
    %99 = arith.addf %81, %98 : vector<1x16x170xf32>
    %c0_104 = arith.constant 0 : index
    %c0_105 = arith.constant 0 : index
    %c3_106 = arith.constant 3 : index
    %100 = vector.load %arg3[%c0_104, %c0_105, %c3_106] : memref<1x22x176xf32, #tpu.memory_space<vmem>>, vector<1x16x170xf32>
    %c0_107 = arith.constant 0 : index
    %c3_108 = arith.constant 3 : index
    %c0_109 = arith.constant 0 : index
    %101 = vector.load %arg3[%c0_107, %c3_108, %c0_109] : memref<1x22x176xf32, #tpu.memory_space<vmem>>, vector<1x16x170xf32>
    %102 = arith.addf %100, %101 : vector<1x16x170xf32>
    %c0_110 = arith.constant 0 : index
    %c3_111 = arith.constant 3 : index
    %c6_112 = arith.constant 6 : index
    %103 = vector.load %arg3[%c0_110, %c3_111, %c6_112] : memref<1x22x176xf32, #tpu.memory_space<vmem>>, vector<1x16x170xf32>
    %104 = arith.addf %102, %103 : vector<1x16x170xf32>
    %c0_113 = arith.constant 0 : index
    %c6_114 = arith.constant 6 : index
    %c3_115 = arith.constant 3 : index
    %105 = vector.load %arg3[%c0_113, %c6_114, %c3_115] : memref<1x22x176xf32, #tpu.memory_space<vmem>>, vector<1x16x170xf32>
    %106 = arith.addf %104, %105 : vector<1x16x170xf32>
    %cst_116 = arith.constant 4.300000e-03 : f32
    %107 = vector.broadcast %cst_116 : f32 to vector<1x16x170xf32>
    %108 = arith.mulf %107, %106 : vector<1x16x170xf32>
    %109 = arith.addf %99, %108 : vector<1x16x170xf32>
    %c0_117 = arith.constant 0 : index
    %c1_118 = arith.constant 1 : index
    %c1_119 = arith.constant 1 : index
    %110 = vector.load %arg3[%c0_117, %c1_118, %c1_119] : memref<1x22x176xf32, #tpu.memory_space<vmem>>, vector<1x16x170xf32>
    %c0_120 = arith.constant 0 : index
    %c1_121 = arith.constant 1 : index
    %c5_122 = arith.constant 5 : index
    %111 = vector.load %arg3[%c0_120, %c1_121, %c5_122] : memref<1x22x176xf32, #tpu.memory_space<vmem>>, vector<1x16x170xf32>
    %112 = arith.addf %110, %111 : vector<1x16x170xf32>
    %c0_123 = arith.constant 0 : index
    %c5_124 = arith.constant 5 : index
    %c1_125 = arith.constant 1 : index
    %113 = vector.load %arg3[%c0_123, %c5_124, %c1_125] : memref<1x22x176xf32, #tpu.memory_space<vmem>>, vector<1x16x170xf32>
    %114 = arith.addf %112, %113 : vector<1x16x170xf32>
    %c0_126 = arith.constant 0 : index
    %c5_127 = arith.constant 5 : index
    %c5_128 = arith.constant 5 : index
    %115 = vector.load %arg3[%c0_126, %c5_127, %c5_128] : memref<1x22x176xf32, #tpu.memory_space<vmem>>, vector<1x16x170xf32>
    %116 = arith.addf %114, %115 : vector<1x16x170xf32>
    %cst_129 = arith.constant 6.200000e-03 : f32
    %117 = vector.broadcast %cst_129 : f32 to vector<1x16x170xf32>
    %118 = arith.mulf %117, %116 : vector<1x16x170xf32>
    %119 = arith.addf %109, %118 : vector<1x16x170xf32>
    %c0_130 = arith.constant 0 : index
    %c1_131 = arith.constant 1 : index
    %c2_132 = arith.constant 2 : index
    %120 = vector.load %arg3[%c0_130, %c1_131, %c2_132] : memref<1x22x176xf32, #tpu.memory_space<vmem>>, vector<1x16x170xf32>
    %c0_133 = arith.constant 0 : index
    %c1_134 = arith.constant 1 : index
    %c4_135 = arith.constant 4 : index
    %121 = vector.load %arg3[%c0_133, %c1_134, %c4_135] : memref<1x22x176xf32, #tpu.memory_space<vmem>>, vector<1x16x170xf32>
    %122 = arith.addf %120, %121 : vector<1x16x170xf32>
    %c0_136 = arith.constant 0 : index
    %c2_137 = arith.constant 2 : index
    %c1_138 = arith.constant 1 : index
    %123 = vector.load %arg3[%c0_136, %c2_137, %c1_138] : memref<1x22x176xf32, #tpu.memory_space<vmem>>, vector<1x16x170xf32>
    %124 = arith.addf %122, %123 : vector<1x16x170xf32>
    %c0_139 = arith.constant 0 : index
    %c2_140 = arith.constant 2 : index
    %c5_141 = arith.constant 5 : index
    %125 = vector.load %arg3[%c0_139, %c2_140, %c5_141] : memref<1x22x176xf32, #tpu.memory_space<vmem>>, vector<1x16x170xf32>
    %126 = arith.addf %124, %125 : vector<1x16x170xf32>
    %c0_142 = arith.constant 0 : index
    %c4_143 = arith.constant 4 : index
    %c1_144 = arith.constant 1 : index
    %127 = vector.load %arg3[%c0_142, %c4_143, %c1_144] : memref<1x22x176xf32, #tpu.memory_space<vmem>>, vector<1x16x170xf32>
    %128 = arith.addf %126, %127 : vector<1x16x170xf32>
    %c0_145 = arith.constant 0 : index
    %c4_146 = arith.constant 4 : index
    %c5_147 = arith.constant 5 : index
    %129 = vector.load %arg3[%c0_145, %c4_146, %c5_147] : memref<1x22x176xf32, #tpu.memory_space<vmem>>, vector<1x16x170xf32>
    %130 = arith.addf %128, %129 : vector<1x16x170xf32>
    %c0_148 = arith.constant 0 : index
    %c5_149 = arith.constant 5 : index
    %c2_150 = arith.constant 2 : index
    %131 = vector.load %arg3[%c0_148, %c5_149, %c2_150] : memref<1x22x176xf32, #tpu.memory_space<vmem>>, vector<1x16x170xf32>
    %132 = arith.addf %130, %131 : vector<1x16x170xf32>
    %c0_151 = arith.constant 0 : index
    %c5_152 = arith.constant 5 : index
    %c4_153 = arith.constant 4 : index
    %133 = vector.load %arg3[%c0_151, %c5_152, %c4_153] : memref<1x22x176xf32, #tpu.memory_space<vmem>>, vector<1x16x170xf32>
    %134 = arith.addf %132, %133 : vector<1x16x170xf32>
    %cst_154 = arith.constant 1.860000e-02 : f32
    %135 = vector.broadcast %cst_154 : f32 to vector<1x16x170xf32>
    %136 = arith.mulf %135, %134 : vector<1x16x170xf32>
    %137 = arith.addf %119, %136 : vector<1x16x170xf32>
    %c0_155 = arith.constant 0 : index
    %c1_156 = arith.constant 1 : index
    %c3_157 = arith.constant 3 : index
    %138 = vector.load %arg3[%c0_155, %c1_156, %c3_157] : memref<1x22x176xf32, #tpu.memory_space<vmem>>, vector<1x16x170xf32>
    %c0_158 = arith.constant 0 : index
    %c3_159 = arith.constant 3 : index
    %c1_160 = arith.constant 1 : index
    %139 = vector.load %arg3[%c0_158, %c3_159, %c1_160] : memref<1x22x176xf32, #tpu.memory_space<vmem>>, vector<1x16x170xf32>
    %140 = arith.addf %138, %139 : vector<1x16x170xf32>
    %c0_161 = arith.constant 0 : index
    %c3_162 = arith.constant 3 : index
    %c5_163 = arith.constant 5 : index
    %141 = vector.load %arg3[%c0_161, %c3_162, %c5_163] : memref<1x22x176xf32, #tpu.memory_space<vmem>>, vector<1x16x170xf32>
    %142 = arith.addf %140, %141 : vector<1x16x170xf32>
    %c0_164 = arith.constant 0 : index
    %c5_165 = arith.constant 5 : index
    %c3_166 = arith.constant 3 : index
    %143 = vector.load %arg3[%c0_164, %c5_165, %c3_166] : memref<1x22x176xf32, #tpu.memory_space<vmem>>, vector<1x16x170xf32>
    %144 = arith.addf %142, %143 : vector<1x16x170xf32>
    %cst_167 = arith.constant 2.690000e-02 : f32
    %145 = vector.broadcast %cst_167 : f32 to vector<1x16x170xf32>
    %146 = arith.mulf %145, %144 : vector<1x16x170xf32>
    %147 = arith.addf %137, %146 : vector<1x16x170xf32>
    %c0_168 = arith.constant 0 : index
    %c2_169 = arith.constant 2 : index
    %c2_170 = arith.constant 2 : index
    %148 = vector.load %arg3[%c0_168, %c2_169, %c2_170] : memref<1x22x176xf32, #tpu.memory_space<vmem>>, vector<1x16x170xf32>
    %c0_171 = arith.constant 0 : index
    %c2_172 = arith.constant 2 : index
    %c4_173 = arith.constant 4 : index
    %149 = vector.load %arg3[%c0_171, %c2_172, %c4_173] : memref<1x22x176xf32, #tpu.memory_space<vmem>>, vector<1x16x170xf32>
    %150 = arith.addf %148, %149 : vector<1x16x170xf32>
    %c0_174 = arith.constant 0 : index
    %c4_175 = arith.constant 4 : index
    %c2_176 = arith.constant 2 : index
    %151 = vector.load %arg3[%c0_174, %c4_175, %c2_176] : memref<1x22x176xf32, #tpu.memory_space<vmem>>, vector<1x16x170xf32>
    %152 = arith.addf %150, %151 : vector<1x16x170xf32>
    %c0_177 = arith.constant 0 : index
    %c4_178 = arith.constant 4 : index
    %c4_179 = arith.constant 4 : index
    %153 = vector.load %arg3[%c0_177, %c4_178, %c4_179] : memref<1x22x176xf32, #tpu.memory_space<vmem>>, vector<1x16x170xf32>
    %154 = arith.addf %152, %153 : vector<1x16x170xf32>
    %cst_180 = arith.constant 5.610000e-02 : f32
    %155 = vector.broadcast %cst_180 : f32 to vector<1x16x170xf32>
    %156 = arith.mulf %155, %154 : vector<1x16x170xf32>
    %157 = arith.addf %147, %156 : vector<1x16x170xf32>
    %c0_181 = arith.constant 0 : index
    %c2_182 = arith.constant 2 : index
    %c3_183 = arith.constant 3 : index
    %158 = vector.load %arg3[%c0_181, %c2_182, %c3_183] : memref<1x22x176xf32, #tpu.memory_space<vmem>>, vector<1x16x170xf32>
    %c0_184 = arith.constant 0 : index
    %c3_185 = arith.constant 3 : index
    %c2_186 = arith.constant 2 : index
    %159 = vector.load %arg3[%c0_184, %c3_185, %c2_186] : memref<1x22x176xf32, #tpu.memory_space<vmem>>, vector<1x16x170xf32>
    %160 = arith.addf %158, %159 : vector<1x16x170xf32>
    %c0_187 = arith.constant 0 : index
    %c3_188 = arith.constant 3 : index
    %c4_189 = arith.constant 4 : index
    %161 = vector.load %arg3[%c0_187, %c3_188, %c4_189] : memref<1x22x176xf32, #tpu.memory_space<vmem>>, vector<1x16x170xf32>
    %162 = arith.addf %160, %161 : vector<1x16x170xf32>
    %c0_190 = arith.constant 0 : index
    %c4_191 = arith.constant 4 : index
    %c3_192 = arith.constant 3 : index
    %163 = vector.load %arg3[%c0_190, %c4_191, %c3_192] : memref<1x22x176xf32, #tpu.memory_space<vmem>>, vector<1x16x170xf32>
    %164 = arith.addf %162, %163 : vector<1x16x170xf32>
    %cst_193 = arith.constant 8.100000e-02 : f32
    %165 = vector.broadcast %cst_193 : f32 to vector<1x16x170xf32>
    %166 = arith.mulf %165, %164 : vector<1x16x170xf32>
    %167 = arith.addf %157, %166 : vector<1x16x170xf32>
    %c0_194 = arith.constant 0 : index
    %c3_195 = arith.constant 3 : index
    %c3_196 = arith.constant 3 : index
    %168 = vector.load %arg3[%c0_194, %c3_195, %c3_196] : memref<1x22x176xf32, #tpu.memory_space<vmem>>, vector<1x16x170xf32>
    %cst_197 = arith.constant 1.169000e-01 : f32
    %169 = vector.broadcast %cst_197 : f32 to vector<1x16x170xf32>
    %170 = arith.mulf %169, %168 : vector<1x16x170xf32>
    %171 = arith.addf %167, %170 : vector<1x16x170xf32>
    %172 = vector.extract_strided_slice %171 {offsets = [0, 0, 0], sizes = [1, 16, 16], strides = [1, 1, 1]} : vector<1x16x170xf32> to vector<1x16x16xf32>
    %173 = vector.extract_strided_slice %171 {offsets = [0, 0, 22], sizes = [1, 16, 16], strides = [1, 1, 1]} : vector<1x16x170xf32> to vector<1x16x16xf32>
    %174 = vector.extract_strided_slice %171 {offsets = [0, 0, 44], sizes = [1, 16, 16], strides = [1, 1, 1]} : vector<1x16x170xf32> to vector<1x16x16xf32>
    %175 = vector.extract_strided_slice %171 {offsets = [0, 0, 66], sizes = [1, 16, 16], strides = [1, 1, 1]} : vector<1x16x170xf32> to vector<1x16x16xf32>
    %176 = vector.extract_strided_slice %171 {offsets = [0, 0, 88], sizes = [1, 16, 16], strides = [1, 1, 1]} : vector<1x16x170xf32> to vector<1x16x16xf32>
    %177 = vector.extract_strided_slice %171 {offsets = [0, 0, 110], sizes = [1, 16, 16], strides = [1, 1, 1]} : vector<1x16x170xf32> to vector<1x16x16xf32>
    %178 = vector.extract_strided_slice %171 {offsets = [0, 0, 132], sizes = [1, 16, 16], strides = [1, 1, 1]} : vector<1x16x170xf32> to vector<1x16x16xf32>
    %179 = vector.extract_strided_slice %171 {offsets = [0, 0, 154], sizes = [1, 16, 16], strides = [1, 1, 1]} : vector<1x16x170xf32> to vector<1x16x16xf32>
    %180 = tpu.concatenate %172, %173, %174, %175, %176, %177, %178, %179 in 2 : vector<1x16x16xf32>, vector<1x16x16xf32>, vector<1x16x16xf32>, vector<1x16x16xf32>, vector<1x16x16xf32>, vector<1x16x16xf32>, vector<1x16x16xf32>, vector<1x16x16xf32> -> vector<1x16x128xf32>
    %c0_198 = arith.constant 0 : index
    %c0_199 = arith.constant 0 : index
    %c0_200 = arith.constant 0 : index
    %181 = vector.load %arg2[%c0_198, %c0_199, %c0_200] : memref<1x16x128xf32, #tpu.memory_space<vmem>>, vector<1x16x128xf32>
    tpu.vector_store %arg2[%c0_198, %c0_199, %c0_200], %180 {strides = array<i32>} : memref<1x16x128xf32, #tpu.memory_space<vmem>>, vector<1x16x128xf32>,
    return
  }
  func.func @transform_0(%arg0: i32) -> (i32, i32, i32) {
    %c0_i32 = arith.constant 0 : i32
    %c0_i32_0 = arith.constant 0 : i32
    %c0_i32_1 = arith.constant 0 : i32
    return %arg0, %c0_i32, %c0_i32_0 : i32, i32, i32
  }
  func.func @transform_1(%arg0: i32) -> (i32, i32, i32) {
    %c0_i32 = arith.constant 0 : i32
    %c0_i32_0 = arith.constant 0 : i32
    %c0_i32_1 = arith.constant 0 : i32
    return %arg0, %c0_i32, %c0_i32_0 : i32, i32, i32
  }
}

</mosaic_0001>

<llo_original>
// kernel: tpu_custom_call.1
$region0: #{tpu_custom_call.1}
  #allocation0 [shape = 'u32[]', space=smem, size = 0x4, offset = 0x4, fixed_abs, tag = 'smem constant byte address 0x4 - core index']
  #allocation1 [shape = 'u32[144,128]{1,0:T(1,128)}', space=vmem, size = 0x12000, scoped, tag = 'internal scratch']
  #allocation2 [shape = 'f32[1,22,176]{2,1,0:T(8,128)}', space=vmem, size = 0x6000, scoped, tag = 'scratch operand']
  %s0 = inlined_call_operand.hbm [shape: f32[8,16,16], index: 0, kind: input, shape index: {}]
  %s1 = inlined_call_operand.hbm [shape: f32[1,16,128], index: 1, kind: output, shape index: {}]
  %s2 = sld [smem:[#allocation0]]
  $region18: #{tpu_custom_call.1} parent=0
    _
  %s4 = ssub.s32 1, %s2
  %s5 = scalar_select 0, %s4, %s2
  $region1: #{tpu_custom_call.1} parent=0
    #allocation3 [shape = 'u8[65536]{0}', space=vmem, size = 0x10000, scoped, tag = 'input window, operand 0, single buffered']
    #allocation4 [shape = 's32[1]{0}', space=sflag, size = 0x4, scoped, tag = 'scoped memory for tpu_custom_call.1']
    #allocation5 [shape = 's32[1]{0}', space=sflag, size = 0x4, scoped, tag = 'scoped memory for tpu_custom_call.1']
    #allocation6 [shape = 'u8[8192]{0}', space=vmem, size = 0x2000, scoped, tag = 'output window, operand 0, single buffered']
    %6 = vsyncpa [#allocation4], 0
    %7 = vsyncpa [#allocation5], 0
    // Predicated region
    $region2: #{tpu_custom_call.1} parent=1 // pred_check
      _
    $region3: #{tpu_custom_call.1} parent=1 // pred_check_branch
      %9 = sbr.rel (0) target = $region5
    $region4: #{tpu_custom_call.1} parent=1 // pred_region
      %s11 = ssub.s32 2048, 2048
      %12 = vsyncadd [#allocation4], %s11
      %s13 = sshll.u32 [#allocation3], 4
      %s14 = int_to_ptr.vmem [resolvable:$true] %s13
      %19 = dma.hbm_to_vmem [thread:$0]  %s0, 2048, %s14, [#allocation4], 128, 128, 8
    $region5: #{tpu_custom_call.1} parent=1 // pred_fallthru
      _
    // Predicated region
    $region6: #{tpu_custom_call.1} parent=1 // pred_check
      _
    $region7: #{tpu_custom_call.1} parent=1 // pred_check_branch
      %21 = sbr.rel (0) target = $region9
    $region8: #{tpu_custom_call.1} parent=1 // pred_region
      %22 = dma.done [#allocation4], 2048
    $region9: #{tpu_custom_call.1} parent=1 // pred_fallthru
      _
    %23 = vst [vmem:[#allocation2] sm:$0x7] 0.0
    %vm24 = vcmask 387072
    %25 = vst.msk [vmem:[#allocation2 + $0x8] sm:$0x7] %vm24, 0.0
    %26 = vst [vmem:[#allocation2 + $0x20] sm:$0x38] 0.0
    %vm27 = vcmask 390147
    %28 = vst.msk [vmem:[#allocation2 + $0x28] sm:$0x38] %vm27, 0.0
    %v29 = vld [vmem:[#allocation3] sm:$0xff]
    %v30 = vld [vmem:[#allocation3 + $0x8] sm:$0xff]
    %33 = vrot.lane.b32.xlu0 %v29, 3
    %v34 = vpop.permute.xlu0 %33
    %35 = vrot.lane.b32.xlu0 %v30, 3
    %v36 = vpop.permute.xlu0 %35
    %vm39 = vcmask 23552
    %v40 = vsel %vm39, 0.0, %v34
    %v41 = vsel %vm39, 0.0, %v36
    %vm42 = vcmask 154624
    %v43 = vsel %vm42, %v40, 0.0
    %v44 = vsel %vm42, %v41, 0.0
    %vm47 = vcmask 1042432
    %v48 = vrot.slane %v43, 5
    %v49 = vrot.slane %v44, 5
    %v50 = vsel %vm47, %v48, %v49
    %vm54 = vcmask 179203
    %55 = vst.msk [vmem:[#allocation2] sm:$0xf8] %vm54, %v48
    %vm56 = vcmask 179200
    %57 = vst.msk [vmem:[#allocation2 + $0x10] sm:$0xff] %vm56, %v50
    %vm58 = vcmask 174080
    %59 = vst.msk [vmem:[#allocation2 + $0x20] sm:$0x7] %vm58, %v49
    %s60 = scalar_lea.vmem [#allocation3], 16
    %v61 = vld [vmem:[%s60] sm:$0xff]
    %v62 = vld [vmem:[%s60 + $0x8] sm:$0xff]
    %65 = vrot.lane.b32.xlu0 %v61, 3
    %v66 = vpop.permute.xlu0 %65
    %67 = vrot.lane.b32.xlu0 %v62, 3
    %v68 = vpop.permute.xlu0 %67
    %v71 = vsel %vm39, 0.0, %v66
    %v72 = vsel %vm39, 0.0, %v68
    %v73 = vsel %vm42, %v71, 0.0
    %v74 = vsel %vm42, %v72, 0.0
    %v77 = vrot.slane %v73, 5
    %v78 = vrot.slane %v74, 5
    %v79 = vsel %vm47, %v77, %v78
    %80 = vrot.lane.b32.xlu0 %v77, 22
    %v81 = vpop.permute.xlu0 %80
    %82 = vrot.lane.b32.xlu0 %v79, 22
    %v83 = vpop.permute.xlu0 %82
    %84 = vrot.lane.b32.xlu0 %v78, 22
    %v85 = vpop.permute.xlu0 %84
    %vm89 = vcmask 359603
    %90 = vst.msk [vmem:[#allocation2] sm:$0xf8] %vm89, %v81
    %vm91 = vcmask 359600
    %92 = vst.msk [vmem:[#allocation2 + $0x10] sm:$0xff] %vm91, %v83
    %vm93 = vcmask 354480
    %94 = vst.msk [vmem:[#allocation2 + $0x20] sm:$0x7] %vm93, %v85
    %s95 = scalar_lea.vmem [#allocation3], 32
    %v96 = vld [vmem:[%s95] sm:$0xff]
    %v97 = vld [vmem:[%s95 + $0x8] sm:$0xff]
    %100 = vrot.lane.b32.xlu0 %v96, 3
    %v101 = vpop.permute.xlu0 %100
    %102 = vrot.lane.b32.xlu0 %v97, 3
    %v103 = vpop.permute.xlu0 %102
    %v106 = vsel %vm39, 0.0, %v101
    %v107 = vsel %vm39, 0.0, %v103
    %v108 = vsel %vm42, %v106, 0.0
    %v109 = vsel %vm42, %v107, 0.0
    %v112 = vrot.slane %v108, 5
    %v113 = vrot.slane %v109, 5
    %v114 = vsel %vm47, %v112, %v113
    %115 = vrot.lane.b32.xlu0 %v112, 44
    %v116 = vpop.permute.xlu0 %115
    %117 = vrot.lane.b32.xlu0 %v114, 44
    %v118 = vpop.permute.xlu0 %117
    %119 = vrot.lane.b32.xlu0 %v113, 44
    %v120 = vpop.permute.xlu0 %119
    %vm124 = vcmask 540003
    %125 = vst.msk [vmem:[#allocation2] sm:$0xf8] %vm124, %v116
    %vm126 = vcmask 540000
    %127 = vst.msk [vmem:[#allocation2 + $0x10] sm:$0xff] %vm126, %v118
    %vm128 = vcmask 534880
    %129 = vst.msk [vmem:[#allocation2 + $0x20] sm:$0x7] %vm128, %v120
    %s130 = scalar_lea.vmem [#allocation3], 48
    %v131 = vld [vmem:[%s130] sm:$0xff]
    %v132 = vld [vmem:[%s130 + $0x8] sm:$0xff]
    %135 = vrot.lane.b32.xlu0 %v131, 3
    %v136 = vpop.permute.xlu0 %135
    %137 = vrot.lane.b32.xlu0 %v132, 3
    %v138 = vpop.permute.xlu0 %137
    %v141 = vsel %vm39, 0.0, %v136
    %v142 = vsel %vm39, 0.0, %v138
    %v143 = vsel %vm42, %v141, 0.0
    %v144 = vsel %vm42, %v142, 0.0
    %v147 = vrot.slane %v143, 5
    %v148 = vrot.slane %v144, 5
    %v149 = vsel %vm47, %v147, %v148
    %150 = vrot.lane.b32.xlu0 %v147, 66
    %v151 = vpop.permute.xlu0 %150
    %152 = vrot.lane.b32.xlu0 %v149, 66
    %v153 = vpop.permute.xlu0 %152
    %154 = vrot.lane.b32.xlu0 %v148, 66
    %v155 = vpop.permute.xlu0 %154
    %vm159 = vcmask 720403
    %160 = vst.msk [vmem:[#allocation2] sm:$0xf8] %vm159, %v151
    %vm161 = vcmask 720400
    %162 = vst.msk [vmem:[#allocation2 + $0x10] sm:$0xff] %vm161, %v153
    %vm163 = vcmask 715280
    %164 = vst.msk [vmem:[#allocation2 + $0x20] sm:$0x7] %vm163, %v155
    %s165 = scalar_lea.vmem [#allocation3], 64
    %v166 = vld [vmem:[%s165] sm:$0xff]
    %v167 = vld [vmem:[%s165 + $0x8] sm:$0xff]
    %170 = vrot.lane.b32.xlu0 %v166, 3
    %v171 = vpop.permute.xlu0 %170
    %172 = vrot.lane.b32.xlu0 %v167, 3
    %v173 = vpop.permute.xlu0 %172
    %v176 = vsel %vm39, 0.0, %v171
    %v177 = vsel %vm39, 0.0, %v173
    %v178 = vsel %vm42, %v176, 0.0
    %v179 = vsel %vm42, %v177, 0.0
    %v182 = vrot.slane %v178, 5
    %v183 = vrot.slane %v179, 5
    %v184 = vsel %vm47, %v182, %v183
    %185 = vrot.lane.b32.xlu0 %v182, 88
    %v186 = vpop.permute.xlu0 %185
    %187 = vrot.lane.b32.xlu0 %v184, 88
    %v188 = vpop.permute.xlu0 %187
    %189 = vrot.lane.b32.xlu0 %v183, 88
    %v190 = vpop.permute.xlu0 %189
    %vm194 = vcmask 900803
    %195 = vst.msk [vmem:[#allocation2] sm:$0xf8] %vm194, %v186
    %vm196 = vcmask 900800
    %197 = vst.msk [vmem:[#allocation2 + $0x10] sm:$0xff] %vm196, %v188
    %vm198 = vcmask 895680
    %199 = vst.msk [vmem:[#allocation2 + $0x20] sm:$0x7] %vm198, %v190
    %s200 = scalar_lea.vmem [#allocation3], 80
    %v201 = vld [vmem:[%s200] sm:$0xff]
    %v202 = vld [vmem:[%s200 + $0x8] sm:$0xff]
    %205 = vrot.lane.b32.xlu0 %v201, 3
    %v206 = vpop.permute.xlu0 %205
    %207 = vrot.lane.b32.xlu0 %v202, 3
    %v208 = vpop.permute.xlu0 %207
    %v211 = vsel %vm39, 0.0, %v206
    %v212 = vsel %vm39, 0.0, %v208
    %v213 = vsel %vm42, %v211, 0.0
    %v214 = vsel %vm42, %v212, 0.0
    %v217 = vrot.slane %v213, 5
    %v218 = vrot.slane %v214, 5
    %v219 = vsel %vm47, %v217, %v218
    %220 = vrot.lane.b32.xlu0 %v217, 110
    %v221 = vpop.permute.xlu0 %220
    %222 = vrot.lane.b32.xlu0 %v219, 110
    %v223 = vpop.permute.xlu0 %222
    %224 = vrot.lane.b32.xlu0 %v218, 110
    %v225 = vpop.permute.xlu0 %224
    %vm229 = vcmask 1048435
    %230 = vst.msk [vmem:[#allocation2] sm:$0xf8] %vm229, %v221
    %vm231 = vcmask 31747
    %232 = vst.msk [vmem:[#allocation2 + $0x8] sm:$0xf8] %vm231, %v221
    %vm233 = vcmask 1048432
    %234 = vst.msk [vmem:[#allocation2 + $0x10] sm:$0xff] %vm233, %v223
    %vm235 = vcmask 31744
    %236 = vst.msk [vmem:[#allocation2 + $0x18] sm:$0xff] %vm235, %v223
    %vm237 = vcmask 1043312
    %238 = vst.msk [vmem:[#allocation2 + $0x20] sm:$0x7] %vm237, %v225
    %vm239 = vcmask 26624
    %240 = vst.msk [vmem:[#allocation2 + $0x28] sm:$0x7] %vm239, %v225
    %s241 = scalar_lea.vmem [#allocation3], 96
    %v242 = vld [vmem:[%s241] sm:$0xff]
    %v243 = vld [vmem:[%s241 + $0x8] sm:$0xff]
    %246 = vrot.lane.b32.xlu0 %v242, 3
    %v247 = vpop.permute.xlu0 %246
    %248 = vrot.lane.b32.xlu0 %v243, 3
    %v249 = vpop.permute.xlu0 %248
    %v252 = vsel %vm39, 0.0, %v247
    %v253 = vsel %vm39, 0.0, %v249
    %v254 = vsel %vm42, %v252, 0.0
    %v255 = vsel %vm42, %v253, 0.0
    %v258 = vrot.slane %v254, 5
    %v259 = vrot.slane %v255, 5
    %v260 = vsel %vm47, %v258, %v259
    %261 = vrot.lane.b32.xlu0 %v258, 4
    %v262 = vpop.permute.xlu0 %261
    %263 = vrot.lane.b32.xlu0 %v260, 4
    %v264 = vpop.permute.xlu0 %263
    %265 = vrot.lane.b32.xlu0 %v259, 4
    %v266 = vpop.permute.xlu0 %265
    %vm270 = vcmask 212003
    %271 = vst.msk [vmem:[#allocation2 + $0x8] sm:$0xf8] %vm270, %v262
    %vm272 = vcmask 212000
    %273 = vst.msk [vmem:[#allocation2 + $0x18] sm:$0xff] %vm272, %v264
    %vm274 = vcmask 206880
    %275 = vst.msk [vmem:[#allocation2 + $0x28] sm:$0x7] %vm274, %v266
    %s276 = scalar_lea.vmem [#allocation3], 112
    %v277 = vld [vmem:[%s276] sm:$0xff]
    %v278 = vld [vmem:[%s276 + $0x8] sm:$0xff]
    %281 = vrot.lane.b32.xlu0 %v277, 3
    %v282 = vpop.permute.xlu0 %281
    %283 = vrot.lane.b32.xlu0 %v278, 3
    %v284 = vpop.permute.xlu0 %283
    %v287 = vsel %vm39, 0.0, %v282
    %v288 = vsel %vm39, 0.0, %v284
    %v289 = vsel %vm42, %v287, 0.0
    %v290 = vsel %vm42, %v288, 0.0
    %v293 = vrot.slane %v289, 5
    %v294 = vrot.slane %v290, 5
    %v295 = vsel %vm47, %v293, %v294
    %296 = vrot.lane.b32.xlu0 %v293, 26
    %v297 = vpop.permute.xlu0 %296
    %298 = vrot.lane.b32.xlu0 %v295, 26
    %v299 = vpop.permute.xlu0 %298
    %300 = vrot.lane.b32.xlu0 %v294, 26
    %v301 = vpop.permute.xlu0 %300
    %vm305 = vcmask 392403
    %306 = vst.msk [vmem:[#allocation2 + $0x8] sm:$0xf8] %vm305, %v297
    %vm307 = vcmask 392400
    %308 = vst.msk [vmem:[#allocation2 + $0x18] sm:$0xff] %vm307, %v299
    %vm309 = vcmask 387280
    %310 = vst.msk [vmem:[#allocation2 + $0x28] sm:$0x7] %vm309, %v301
    %v311 = vld [vmem:[#allocation2] sm:$0xff]
    %v312 = vld [vmem:[#allocation2 + $0x8] sm:$0xff]
    %v313 = vld [vmem:[#allocation2 + $0x10] sm:$0xff]
    %v314 = vld [vmem:[#allocation2 + $0x18] sm:$0xff]
    %319 = vrot.lane.b32.xlu0 %v311, 122
    %v320 = vpop.permute.xlu0 %319
    %321 = vrot.lane.b32.xlu0 %v312, 122
    %v322 = vpop.permute.xlu0 %321
    %323 = vrot.lane.b32.xlu0 %v313, 122
    %v324 = vpop.permute.xlu0 %323
    %325 = vrot.lane.b32.xlu0 %v314, 122
    %v326 = vpop.permute.xlu0 %325
    %vm327 = vcmask 998400
    %v328 = vsel %vm327, %v320, %v322
    %v329 = vsel %vm327, %v324, %v326
    %v334 = vadd.f32 %v311, %v328
    %v335 = vadd.f32 %v312, %v322
    %v336 = vadd.f32 %v313, %v329
    %v337 = vadd.f32 %v314, %v326
    %v338 = vld [vmem:[#allocation2] sm:$0xc0]
    %v339 = vld [vmem:[#allocation2 + $0x8] sm:$0xc0]
    %v340 = vld [vmem:[#allocation2 + $0x20] sm:$0x3f]
    %v341 = vld [vmem:[#allocation2 + $0x28] sm:$0x3f]
    %vm346 = vcmask 1041408
    %v347 = vrot.slane %v338, 6
    %v348 = vrot.slane %v313, 6
    %v349 = vsel %vm346, %v347, %v348
    %v350 = vrot.slane %v339, 6
    %v351 = vrot.slane %v314, 6
    %v352 = vsel %vm346, %v350, %v351
    %v353 = vrot.slane %v340, 6
    %v354 = vsel %vm346, %v348, %v353
    %v355 = vrot.slane %v341, 6
    %v356 = vsel %vm346, %v351, %v355
    %v361 = vadd.f32 %v334, %v349
    %v362 = vadd.f32 %v335, %v352
    %v363 = vadd.f32 %v336, %v354
    %v364 = vadd.f32 %v337, %v356
    %365 = vrot.lane.b32.xlu0 %v349, 122
    %v366 = vpop.permute.xlu0 %365
    %367 = vrot.lane.b32.xlu0 %v352, 122
    %v368 = vpop.permute.xlu0 %367
    %369 = vrot.lane.b32.xlu0 %v354, 122
    %v370 = vpop.permute.xlu0 %369
    %371 = vrot.lane.b32.xlu0 %v356, 122
    %v372 = vpop.permute.xlu0 %371
    %v373 = vsel %vm327, %v366, %v368
    %v374 = vsel %vm327, %v370, %v372
    %v379 = vadd.f32 %v361, %v373
    %v380 = vadd.f32 %v362, %v368
    %v381 = vadd.f32 %v363, %v374
    %v382 = vadd.f32 %v364, %v372
    %v383 = vmul.f32 %v379, 0.0002
    %v384 = vmul.f32 %v380, 0.0002
    %v385 = vmul.f32 %v381, 0.0002
    %v386 = vmul.f32 %v382, 0.0002
    %v387 = vadd.f32 %v383, 0.0
    %v388 = vadd.f32 %v384, 0.0
    %v389 = vadd.f32 %v385, 0.0
    %v390 = vadd.f32 %v386, 0.0
    %391 = vrot.lane.b32.xlu0 %v311, 124
    %v392 = vpop.permute.xlu0 %391
    %393 = vrot.lane.b32.xlu0 %v312, 124
    %v394 = vpop.permute.xlu0 %393
    %395 = vrot.lane.b32.xlu0 %v313, 124
    %v396 = vpop.permute.xlu0 %395
    %397 = vrot.lane.b32.xlu0 %v314, 124
    %v398 = vpop.permute.xlu0 %397
    %vm399 = vcmask 1014784
    %v400 = vsel %vm399, %v392, %v394
    %v401 = vsel %vm399, %v396, %v398
    %v406 = vadd.f32 %v311, %v400
    %v407 = vadd.f32 %v312, %v394
    %v408 = vadd.f32 %v313, %v401
    %v409 = vadd.f32 %v314, %v398
    %v410 = vld [vmem:[#allocation2] sm:$0xfe]
    %v411 = vld [vmem:[#allocation2 + $0x8] sm:$0xfe]
    %v412 = vld [vmem:[#allocation2 + $0x20] sm:$0x1]
    %v413 = vld [vmem:[#allocation2 + $0x28] sm:$0x1]
    %vm418 = vcmask 1046528
    %v419 = vrot.slane %v410, 1
    %v420 = vrot.slane %v313, 1
    %v421 = vsel %vm418, %v419, %v420
    %v422 = vrot.slane %v411, 1
    %v423 = vrot.slane %v314, 1
    %v424 = vsel %vm418, %v422, %v423
    %v425 = vrot.slane %v412, 1
    %v426 = vsel %vm418, %v420, %v425
    %v427 = vrot.slane %v413, 1
    %v428 = vsel %vm418, %v423, %v427
    %429 = vrot.lane.b32.xlu0 %v421, 1
    %v430 = vpop.permute.xlu0 %429
    %431 = vrot.lane.b32.xlu0 %v424, 1
    %v432 = vpop.permute.xlu0 %431
    %433 = vrot.lane.b32.xlu0 %v426, 1
    %v434 = vpop.permute.xlu0 %433
    %435 = vrot.lane.b32.xlu0 %v428, 1
    %v436 = vpop.permute.xlu0 %435
    %vm437 = vcmask 7168
    %v438 = vsel %vm437, %v430, %v432
    %v439 = vsel %vm437, %v434, %v436
    %v444 = vadd.f32 %v406, %v430
    %v445 = vadd.f32 %v407, %v438
    %v446 = vadd.f32 %v408, %v434
    %v447 = vadd.f32 %v409, %v439
    %448 = vrot.lane.b32.xlu0 %v421, 123
    %v449 = vpop.permute.xlu0 %448
    %450 = vrot.lane.b32.xlu0 %v424, 123
    %v451 = vpop.permute.xlu0 %450
    %452 = vrot.lane.b32.xlu0 %v426, 123
    %v453 = vpop.permute.xlu0 %452
    %454 = vrot.lane.b32.xlu0 %v428, 123
    %v455 = vpop.permute.xlu0 %454
    %vm456 = vcmask 1006592
    %v457 = vsel %vm456, %v449, %v451
    %v458 = vsel %vm456, %v453, %v455
    %v463 = vadd.f32 %v444, %v457
    %v464 = vadd.f32 %v445, %v451
    %v465 = vadd.f32 %v446, %v458
    %v466 = vadd.f32 %v447, %v455
    %v467 = vld [vmem:[#allocation2] sm:$0xe0]
    %v468 = vld [vmem:[#allocation2 + $0x8] sm:$0xe0]
    %v469 = vld [vmem:[#allocation2 + $0x20] sm:$0x1f]
    %v470 = vld [vmem:[#allocation2 + $0x28] sm:$0x1f]
    %v475 = vrot.slane %v467, 5
    %v476 = vrot.slane %v313, 5
    %v477 = vsel %vm47, %v475, %v476
    %v478 = vrot.slane %v468, 5
    %v479 = vrot.slane %v314, 5
    %v480 = vsel %vm47, %v478, %v479
    %v481 = vrot.slane %v469, 5
    %v482 = vsel %vm47, %v476, %v481
    %v483 = vrot.slane %v470, 5
    %v484 = vsel %vm47, %v479, %v483
    %485 = vrot.lane.b32.xlu0 %v477, 1
    %v486 = vpop.permute.xlu0 %485
    %487 = vrot.lane.b32.xlu0 %v480, 1
    %v488 = vpop.permute.xlu0 %487
    %489 = vrot.lane.b32.xlu0 %v482, 1
    %v490 = vpop.permute.xlu0 %489
    %491 = vrot.lane.b32.xlu0 %v484, 1
    %v492 = vpop.permute.xlu0 %491
    %v493 = vsel %vm437, %v486, %v488
    %v494 = vsel %vm437, %v490, %v492
    %v499 = vadd.f32 %v463, %v486
    %v500 = vadd.f32 %v464, %v493
    %v501 = vadd.f32 %v465, %v490
    %v502 = vadd.f32 %v466, %v494
    %503 = vrot.lane.b32.xlu0 %v477, 123
    %v504 = vpop.permute.xlu0 %503
    %505 = vrot.lane.b32.xlu0 %v480, 123
    %v506 = vpop.permute.xlu0 %505
    %507 = vrot.lane.b32.xlu0 %v482, 123
    %v508 = vpop.permute.xlu0 %507
    %509 = vrot.lane.b32.xlu0 %v484, 123
    %v510 = vpop.permute.xlu0 %509
    %v511 = vsel %vm456, %v504, %v506
    %v512 = vsel %vm456, %v508, %v510
    %v517 = vadd.f32 %v499, %v511
    %v518 = vadd.f32 %v500, %v506
    %v519 = vadd.f32 %v501, %v512
    %v520 = vadd.f32 %v502, %v510
    %v521 = vadd.f32 %v517, %v349
    %v522 = vadd.f32 %v518, %v352
    %v523 = vadd.f32 %v519, %v354
    %v524 = vadd.f32 %v520, %v356
    %525 = vrot.lane.b32.xlu0 %v349, 124
    %v526 = vpop.permute.xlu0 %525
    %527 = vrot.lane.b32.xlu0 %v352, 124
    %v528 = vpop.permute.xlu0 %527
    %529 = vrot.lane.b32.xlu0 %v354, 124
    %v530 = vpop.permute.xlu0 %529
    %531 = vrot.lane.b32.xlu0 %v356, 124
    %v532 = vpop.permute.xlu0 %531
    %v533 = vsel %vm399, %v526, %v528
    %v534 = vsel %vm399, %v530, %v532
    %v539 = vadd.f32 %v521, %v533
    %v540 = vadd.f32 %v522, %v528
    %v541 = vadd.f32 %v523, %v534
    %v542 = vadd.f32 %v524, %v532
    %v543 = vmul.f32 %v539, 0.001
    %v544 = vmul.f32 %v540, 0.001
    %v545 = vmul.f32 %v541, 0.001
    %v546 = vmul.f32 %v542, 0.001
    %551 = vrot.lane.b32.xlu0 %v543, 127
    %v552 = vpop.permute.xlu0 %551
    %553 = vrot.lane.b32.xlu0 %v544, 127
    %v554 = vpop.permute.xlu0 %553
    %555 = vrot.lane.b32.xlu0 %v545, 127
    %v556 = vpop.permute.xlu0 %555
    %557 = vrot.lane.b32.xlu0 %v546, 127
    %v558 = vpop.permute.xlu0 %557
    %vm559 = vcmask 1039360
    %v560 = vsel %vm559, %v552, %v554
    %v561 = vsel %vm559, %v556, %v558
    %v566 = vadd.f32 %v387, %v560
    %v567 = vadd.f32 %v388, %v554
    %v568 = vadd.f32 %v389, %v561
    %v569 = vadd.f32 %v390, %v558
    %570 = vrot.lane.b32.xlu0 %v311, 126
    %v571 = vpop.permute.xlu0 %570
    %572 = vrot.lane.b32.xlu0 %v312, 126
    %v573 = vpop.permute.xlu0 %572
    %574 = vrot.lane.b32.xlu0 %v313, 126
    %v575 = vpop.permute.xlu0 %574
    %576 = vrot.lane.b32.xlu0 %v314, 126
    %v577 = vpop.permute.xlu0 %576
    %vm578 = vcmask 1031168
    %v579 = vsel %vm578, %v571, %v573
    %v580 = vsel %vm578, %v575, %v577
    %v585 = vadd.f32 %v311, %v579
    %v586 = vadd.f32 %v312, %v573
    %v587 = vadd.f32 %v313, %v580
    %v588 = vadd.f32 %v314, %v577
    %v589 = vld [vmem:[#allocation2] sm:$0xfc]
    %v590 = vld [vmem:[#allocation2 + $0x8] sm:$0xfc]
    %v591 = vld [vmem:[#allocation2 + $0x20] sm:$0x3]
    %v592 = vld [vmem:[#allocation2 + $0x28] sm:$0x3]
    %vm597 = vcmask 1045504
    %v598 = vrot.slane %v589, 2
    %v599 = vrot.slane %v313, 2
    %v600 = vsel %vm597, %v598, %v599
    %v601 = vrot.slane %v590, 2
    %v602 = vrot.slane %v314, 2
    %v603 = vsel %vm597, %v601, %v602
    %v604 = vrot.slane %v591, 2
    %v605 = vsel %vm597, %v599, %v604
    %v606 = vrot.slane %v592, 2
    %v607 = vsel %vm597, %v602, %v606
    %608 = vrot.lane.b32.xlu0 %v600, 2
    %v609 = vpop.permute.xlu0 %608
    %610 = vrot.lane.b32.xlu0 %v603, 2
    %v611 = vpop.permute.xlu0 %610
    %612 = vrot.lane.b32.xlu0 %v605, 2
    %v613 = vpop.permute.xlu0 %612
    %614 = vrot.lane.b32.xlu0 %v607, 2
    %v615 = vpop.permute.xlu0 %614
    %vm616 = vcmask 15360
    %v617 = vsel %vm616, %v609, %v611
    %v618 = vsel %vm616, %v613, %v615
    %v623 = vadd.f32 %v585, %v609
    %v624 = vadd.f32 %v586, %v617
    %v625 = vadd.f32 %v587, %v613
    %v626 = vadd.f32 %v588, %v618
    %627 = vrot.lane.b32.xlu0 %v600, 124
    %v628 = vpop.permute.xlu0 %627
    %629 = vrot.lane.b32.xlu0 %v603, 124
    %v630 = vpop.permute.xlu0 %629
    %631 = vrot.lane.b32.xlu0 %v605, 124
    %v632 = vpop.permute.xlu0 %631
    %633 = vrot.lane.b32.xlu0 %v607, 124
    %v634 = vpop.permute.xlu0 %633
    %v635 = vsel %vm399, %v628, %v630
    %v636 = vsel %vm399, %v632, %v634
    %v641 = vadd.f32 %v623, %v635
    %v642 = vadd.f32 %v624, %v630
    %v643 = vadd.f32 %v625, %v636
    %v644 = vadd.f32 %v626, %v634
    %v645 = vld [vmem:[#allocation2] sm:$0xf0]
    %v646 = vld [vmem:[#allocation2 + $0x8] sm:$0xf0]
    %v647 = vld [vmem:[#allocation2 + $0x20] sm:$0xf]
    %v648 = vld [vmem:[#allocation2 + $0x28] sm:$0xf]
    %vm653 = vcmask 1043456
    %v654 = vrot.slane %v645, 4
    %v655 = vrot.slane %v313, 4
    %v656 = vsel %vm653, %v654, %v655
    %v657 = vrot.slane %v646, 4
    %v658 = vrot.slane %v314, 4
    %v659 = vsel %vm653, %v657, %v658
    %v660 = vrot.slane %v647, 4
    %v661 = vsel %vm653, %v655, %v660
    %v662 = vrot.slane %v648, 4
    %v663 = vsel %vm653, %v658, %v662
    %664 = vrot.lane.b32.xlu0 %v656, 2
    %v665 = vpop.permute.xlu0 %664
    %666 = vrot.lane.b32.xlu0 %v659, 2
    %v667 = vpop.permute.xlu0 %666
    %668 = vrot.lane.b32.xlu0 %v661, 2
    %v669 = vpop.permute.xlu0 %668
    %670 = vrot.lane.b32.xlu0 %v663, 2
    %v671 = vpop.permute.xlu0 %670
    %v672 = vsel %vm616, %v665, %v667
    %v673 = vsel %vm616, %v669, %v671
    %v678 = vadd.f32 %v641, %v665
    %v679 = vadd.f32 %v642, %v672
    %v680 = vadd.f32 %v643, %v669
    %v681 = vadd.f32 %v644, %v673
    %682 = vrot.lane.b32.xlu0 %v656, 124
    %v683 = vpop.permute.xlu0 %682
    %684 = vrot.lane.b32.xlu0 %v659, 124
    %v685 = vpop.permute.xlu0 %684
    %686 = vrot.lane.b32.xlu0 %v661, 124
    %v687 = vpop.permute.xlu0 %686
    %688 = vrot.lane.b32.xlu0 %v663, 124
    %v689 = vpop.permute.xlu0 %688
    %v690 = vsel %vm399, %v683, %v685
    %v691 = vsel %vm399, %v687, %v689
    %v696 = vadd.f32 %v678, %v690
    %v697 = vadd.f32 %v679, %v685
    %v698 = vadd.f32 %v680, %v691
    %v699 = vadd.f32 %v681, %v689
    %v700 = vadd.f32 %v696, %v349
    %v701 = vadd.f32 %v697, %v352
    %v702 = vadd.f32 %v698, %v354
    %v703 = vadd.f32 %v699, %v356
    %704 = vrot.lane.b32.xlu0 %v349, 126
    %v705 = vpop.permute.xlu0 %704
    %706 = vrot.lane.b32.xlu0 %v352, 126
    %v707 = vpop.permute.xlu0 %706
    %708 = vrot.lane.b32.xlu0 %v354, 126
    %v709 = vpop.permute.xlu0 %708
    %710 = vrot.lane.b32.xlu0 %v356, 126
    %v711 = vpop.permute.xlu0 %710
    %v712 = vsel %vm578, %v705, %v707
    %v713 = vsel %vm578, %v709, %v711
    %v718 = vadd.f32 %v700, %v712
    %v719 = vadd.f32 %v701, %v707
    %v720 = vadd.f32 %v702, %v713
    %v721 = vadd.f32 %v703, %v711
    %v722 = vmul.f32 %v718, 0.003
    %v723 = vmul.f32 %v719, 0.003
    %v724 = vmul.f32 %v720, 0.003
    %v725 = vmul.f32 %v721, 0.003
    %730 = vrot.lane.b32.xlu0 %v722, 126
    %v731 = vpop.permute.xlu0 %730
    %732 = vrot.lane.b32.xlu0 %v723, 126
    %v733 = vpop.permute.xlu0 %732
    %734 = vrot.lane.b32.xlu0 %v724, 126
    %v735 = vpop.permute.xlu0 %734
    %736 = vrot.lane.b32.xlu0 %v725, 126
    %v737 = vpop.permute.xlu0 %736
    %v738 = vsel %vm578, %v731, %v733
    %v739 = vsel %vm578, %v735, %v737
    %v744 = vadd.f32 %v566, %v738
    %v745 = vadd.f32 %v567, %v733
    %v746 = vadd.f32 %v568, %v739
    %v747 = vadd.f32 %v569, %v737
    %v748 = vld [vmem:[#allocation2] sm:$0xf8]
    %v749 = vld [vmem:[#allocation2 + $0x8] sm:$0xf8]
    %v750 = vld [vmem:[#allocation2 + $0x20] sm:$0x7]
    %v751 = vld [vmem:[#allocation2 + $0x28] sm:$0x7]
    %vm756 = vcmask 1044480
    %v757 = vrot.slane %v748, 3
    %v758 = vrot.slane %v313, 3
    %v759 = vsel %vm756, %v757, %v758
    %v760 = vrot.slane %v749, 3
    %v761 = vrot.slane %v314, 3
    %v762 = vsel %vm756, %v760, %v761
    %v763 = vrot.slane %v750, 3
    %v764 = vsel %vm756, %v758, %v763
    %v765 = vrot.slane %v751, 3
    %v766 = vsel %vm756, %v761, %v765
    %767 = vrot.lane.b32.xlu0 %v759, 3
    %v768 = vpop.permute.xlu0 %767
    %769 = vrot.lane.b32.xlu0 %v762, 3
    %v770 = vpop.permute.xlu0 %769
    %771 = vrot.lane.b32.xlu0 %v764, 3
    %v772 = vpop.permute.xlu0 %771
    %773 = vrot.lane.b32.xlu0 %v766, 3
    %v774 = vpop.permute.xlu0 %773
    %v775 = vsel %vm39, %v768, %v770
    %v776 = vsel %vm39, %v772, %v774
    %v781 = vadd.f32 %v311, %v768
    %v782 = vadd.f32 %v312, %v775
    %v783 = vadd.f32 %v313, %v772
    %v784 = vadd.f32 %v314, %v776
    %785 = vrot.lane.b32.xlu0 %v759, 125
    %v786 = vpop.permute.xlu0 %785
    %787 = vrot.lane.b32.xlu0 %v762, 125
    %v788 = vpop.permute.xlu0 %787
    %789 = vrot.lane.b32.xlu0 %v764, 125
    %v790 = vpop.permute.xlu0 %789
    %791 = vrot.lane.b32.xlu0 %v766, 125
    %v792 = vpop.permute.xlu0 %791
    %vm793 = vcmask 1022976
    %v794 = vsel %vm793, %v786, %v788
    %v795 = vsel %vm793, %v790, %v792
    %v800 = vadd.f32 %v781, %v794
    %v801 = vadd.f32 %v782, %v788
    %v802 = vadd.f32 %v783, %v795
    %v803 = vadd.f32 %v784, %v792
    %v804 = vadd.f32 %v800, %v349
    %v805 = vadd.f32 %v801, %v352
    %v806 = vadd.f32 %v802, %v354
    %v807 = vadd.f32 %v803, %v356
    %v808 = vmul.f32 %v804, 0.0043
    %v809 = vmul.f32 %v805, 0.0043
    %v810 = vmul.f32 %v806, 0.0043
    %v811 = vmul.f32 %v807, 0.0043
    %816 = vrot.lane.b32.xlu0 %v808, 125
    %v817 = vpop.permute.xlu0 %816
    %818 = vrot.lane.b32.xlu0 %v809, 125
    %v819 = vpop.permute.xlu0 %818
    %820 = vrot.lane.b32.xlu0 %v810, 125
    %v821 = vpop.permute.xlu0 %820
    %822 = vrot.lane.b32.xlu0 %v811, 125
    %v823 = vpop.permute.xlu0 %822
    %v824 = vsel %vm793, %v817, %v819
    %v825 = vsel %vm793, %v821, %v823
    %v830 = vadd.f32 %v744, %v824
    %v831 = vadd.f32 %v745, %v819
    %v832 = vadd.f32 %v746, %v825
    %v833 = vadd.f32 %v747, %v823
    %834 = vrot.lane.b32.xlu0 %v410, 124
    %v835 = vpop.permute.xlu0 %834
    %836 = vrot.lane.b32.xlu0 %v411, 124
    %v837 = vpop.permute.xlu0 %836
    %838 = vrot.lane.b32.xlu0 %v412, 124
    %v839 = vpop.permute.xlu0 %838
    %840 = vrot.lane.b32.xlu0 %v413, 124
    %v841 = vpop.permute.xlu0 %840
    %v842 = vsel %vm399, %v835, %v837
    %v843 = vsel %vm399, %v839, %v841
    %v848 = vadd.f32 %v410, %v842
    %v849 = vadd.f32 %v411, %v837
    %v850 = vadd.f32 %v412, %v843
    %v851 = vadd.f32 %v413, %v841
    %v852 = vrot.slane %v467, 4
    %v853 = vsel %vm653, %v852, %v655
    %v854 = vrot.slane %v468, 4
    %v855 = vsel %vm653, %v854, %v658
    %v856 = vrot.slane %v469, 4
    %v857 = vsel %vm653, %v655, %v856
    %v858 = vrot.slane %v470, 4
    %v859 = vsel %vm653, %v658, %v858
    %v866 = vadd.f32 %v848, %v853
    %v867 = vadd.f32 %v849, %v855
    %v868 = vadd.f32 %v408, %v857
    %v869 = vadd.f32 %v409, %v859
    %v870 = vadd.f32 %v850, %v856
    %v871 = vadd.f32 %v851, %v858
    %872 = vrot.lane.b32.xlu0 %v853, 124
    %v873 = vpop.permute.xlu0 %872
    %874 = vrot.lane.b32.xlu0 %v855, 124
    %v875 = vpop.permute.xlu0 %874
    %876 = vrot.lane.b32.xlu0 %v857, 124
    %v877 = vpop.permute.xlu0 %876
    %878 = vrot.lane.b32.xlu0 %v859, 124
    %v879 = vpop.permute.xlu0 %878
    %880 = vrot.lane.b32.xlu0 %v856, 124
    %v881 = vpop.permute.xlu0 %880
    %882 = vrot.lane.b32.xlu0 %v858, 124
    %v883 = vpop.permute.xlu0 %882
    %v884 = vsel %vm399, %v873, %v875
    %v885 = vsel %vm399, %v877, %v879
    %v886 = vsel %vm399, %v881, %v883
    %v893 = vadd.f32 %v866, %v884
    %v894 = vadd.f32 %v867, %v875
    %v895 = vadd.f32 %v868, %v885
    %v896 = vadd.f32 %v869, %v879
    %v897 = vadd.f32 %v870, %v886
    %v898 = vadd.f32 %v871, %v883
    %v899 = vmul.f32 %v893, 0.0062
    %v900 = vmul.f32 %v894, 0.0062
    %v901 = vmul.f32 %v895, 0.0062
    %v902 = vmul.f32 %v896, 0.0062
    %v903 = vmul.f32 %v897, 0.0062
    %v904 = vmul.f32 %v898, 0.0062
    %v911 = vrot.slane %v899, 1
    %v912 = vrot.slane %v901, 1
    %v913 = vsel %vm418, %v911, %v912
    %v914 = vrot.slane %v900, 1
    %v915 = vrot.slane %v902, 1
    %v916 = vsel %vm418, %v914, %v915
    %v917 = vrot.slane %v903, 1
    %v918 = vsel %vm418, %v912, %v917
    %v919 = vrot.slane %v904, 1
    %v920 = vsel %vm418, %v915, %v919
    %921 = vrot.lane.b32.xlu0 %v913, 127
    %v922 = vpop.permute.xlu0 %921
    %923 = vrot.lane.b32.xlu0 %v916, 127
    %v924 = vpop.permute.xlu0 %923
    %925 = vrot.lane.b32.xlu0 %v918, 127
    %v926 = vpop.permute.xlu0 %925
    %927 = vrot.lane.b32.xlu0 %v920, 127
    %v928 = vpop.permute.xlu0 %927
    %v929 = vsel %vm559, %v922, %v924
    %v930 = vsel %vm559, %v926, %v928
    %v935 = vadd.f32 %v830, %v929
    %v936 = vadd.f32 %v831, %v924
    %v937 = vadd.f32 %v832, %v930
    %v938 = vadd.f32 %v833, %v928
    %939 = vrot.lane.b32.xlu0 %v410, 126
    %v940 = vpop.permute.xlu0 %939
    %941 = vrot.lane.b32.xlu0 %v411, 126
    %v942 = vpop.permute.xlu0 %941
    %943 = vrot.lane.b32.xlu0 %v412, 126
    %v944 = vpop.permute.xlu0 %943
    %945 = vrot.lane.b32.xlu0 %v413, 126
    %v946 = vpop.permute.xlu0 %945
    %v947 = vsel %vm578, %v940, %v942
    %v948 = vsel %vm578, %v944, %v946
    %v953 = vadd.f32 %v410, %v947
    %v954 = vadd.f32 %v411, %v942
    %v955 = vadd.f32 %v412, %v948
    %v956 = vadd.f32 %v413, %v946
    %v957 = vrot.slane %v589, 1
    %v958 = vsel %vm418, %v957, %v420
    %v959 = vrot.slane %v590, 1
    %v960 = vsel %vm418, %v959, %v423
    %v961 = vrot.slane %v591, 1
    %v962 = vsel %vm418, %v420, %v961
    %v963 = vrot.slane %v592, 1
    %v964 = vsel %vm418, %v423, %v963
    %965 = vrot.lane.b32.xlu0 %v958, 1
    %v966 = vpop.permute.xlu0 %965
    %967 = vrot.lane.b32.xlu0 %v960, 1
    %v968 = vpop.permute.xlu0 %967
    %969 = vrot.lane.b32.xlu0 %v962, 1
    %v970 = vpop.permute.xlu0 %969
    %971 = vrot.lane.b32.xlu0 %v964, 1
    %v972 = vpop.permute.xlu0 %971
    %973 = vrot.lane.b32.xlu0 %v961, 1
    %v974 = vpop.permute.xlu0 %973
    %975 = vrot.lane.b32.xlu0 %v963, 1
    %v976 = vpop.permute.xlu0 %975
    %v977 = vsel %vm437, %v966, %v968
    %v978 = vsel %vm437, %v970, %v972
    %v979 = vsel %vm437, %v974, %v976
    %v986 = vadd.f32 %v953, %v966
    %v987 = vadd.f32 %v954, %v977
    %v988 = vadd.f32 %v587, %v970
    %v989 = vadd.f32 %v588, %v978
    %v990 = vadd.f32 %v955, %v974
    %v991 = vadd.f32 %v956, %v979
    %992 = vrot.lane.b32.xlu0 %v958, 125
    %v993 = vpop.permute.xlu0 %992
    %994 = vrot.lane.b32.xlu0 %v960, 125
    %v995 = vpop.permute.xlu0 %994
    %996 = vrot.lane.b32.xlu0 %v962, 125
    %v997 = vpop.permute.xlu0 %996
    %998 = vrot.lane.b32.xlu0 %v964, 125
    %v999 = vpop.permute.xlu0 %998
    %1000 = vrot.lane.b32.xlu0 %v961, 125
    %v1001 = vpop.permute.xlu0 %1000
    %1002 = vrot.lane.b32.xlu0 %v963, 125
    %v1003 = vpop.permute.xlu0 %1002
    %v1004 = vsel %vm793, %v993, %v995
    %v1005 = vsel %vm793, %v997, %v999
    %v1006 = vsel %vm793, %v1001, %v1003
    %v1013 = vadd.f32 %v986, %v1004
    %v1014 = vadd.f32 %v987, %v995
    %v1015 = vadd.f32 %v988, %v1005
    %v1016 = vadd.f32 %v989, %v999
    %v1017 = vadd.f32 %v990, %v1006
    %v1018 = vadd.f32 %v991, %v1003
    %v1019 = vrot.slane %v645, 3
    %v1020 = vsel %vm756, %v1019, %v758
    %v1021 = vrot.slane %v646, 3
    %v1022 = vsel %vm756, %v1021, %v761
    %v1023 = vrot.slane %v647, 3
    %v1024 = vsel %vm756, %v758, %v1023
    %v1025 = vrot.slane %v648, 3
    %v1026 = vsel %vm756, %v761, %v1025
    %1027 = vrot.lane.b32.xlu0 %v1020, 1
    %v1028 = vpop.permute.xlu0 %1027
    %1029 = vrot.lane.b32.xlu0 %v1022, 1
    %v1030 = vpop.permute.xlu0 %1029
    %1031 = vrot.lane.b32.xlu0 %v1024, 1
    %v1032 = vpop.permute.xlu0 %1031
    %1033 = vrot.lane.b32.xlu0 %v1026, 1
    %v1034 = vpop.permute.xlu0 %1033
    %1035 = vrot.lane.b32.xlu0 %v1023, 1
    %v1036 = vpop.permute.xlu0 %1035
    %1037 = vrot.lane.b32.xlu0 %v1025, 1
    %v1038 = vpop.permute.xlu0 %1037
    %v1039 = vsel %vm437, %v1028, %v1030
    %v1040 = vsel %vm437, %v1032, %v1034
    %v1041 = vsel %vm437, %v1036, %v1038
    %v1048 = vadd.f32 %v1013, %v1028
    %v1049 = vadd.f32 %v1014, %v1039
    %v1050 = vadd.f32 %v1015, %v1032
    %v1051 = vadd.f32 %v1016, %v1040
    %v1052 = vadd.f32 %v1017, %v1036
    %v1053 = vadd.f32 %v1018, %v1041
    %1054 = vrot.lane.b32.xlu0 %v1020, 125
    %v1055 = vpop.permute.xlu0 %1054
    %1056 = vrot.lane.b32.xlu0 %v1022, 125
    %v1057 = vpop.permute.xlu0 %1056
    %1058 = vrot.lane.b32.xlu0 %v1024, 125
    %v1059 = vpop.permute.xlu0 %1058
    %1060 = vrot.lane.b32.xlu0 %v1026, 125
    %v1061 = vpop.permute.xlu0 %1060
    %1062 = vrot.lane.b32.xlu0 %v1023, 125
    %v1063 = vpop.permute.xlu0 %1062
    %1064 = vrot.lane.b32.xlu0 %v1025, 125
    %v1065 = vpop.permute.xlu0 %1064
    %v1066 = vsel %vm793, %v1055, %v1057
    %v1067 = vsel %vm793, %v1059, %v1061
    %v1068 = vsel %vm793, %v1063, %v1065
    %v1075 = vadd.f32 %v1048, %v1066
    %v1076 = vadd.f32 %v1049, %v1057
    %v1077 = vadd.f32 %v1050, %v1067
    %v1078 = vadd.f32 %v1051, %v1061
    %v1079 = vadd.f32 %v1052, %v1068
    %v1080 = vadd.f32 %v1053, %v1065
    %v1081 = vadd.f32 %v1075, %v853
    %v1082 = vadd.f32 %v1076, %v855
    %v1083 = vadd.f32 %v1077, %v857
    %v1084 = vadd.f32 %v1078, %v859
    %v1085 = vadd.f32 %v1079, %v856
    %v1086 = vadd.f32 %v1080, %v858
    %1087 = vrot.lane.b32.xlu0 %v853, 126
    %v1088 = vpop.permute.xlu0 %1087
    %1089 = vrot.lane.b32.xlu0 %v855, 126
    %v1090 = vpop.permute.xlu0 %1089
    %1091 = vrot.lane.b32.xlu0 %v857, 126
    %v1092 = vpop.permute.xlu0 %1091
    %1093 = vrot.lane.b32.xlu0 %v859, 126
    %v1094 = vpop.permute.xlu0 %1093
    %1095 = vrot.lane.b32.xlu0 %v856, 126
    %v1096 = vpop.permute.xlu0 %1095
    %1097 = vrot.lane.b32.xlu0 %v858, 126
    %v1098 = vpop.permute.xlu0 %1097
    %v1099 = vsel %vm578, %v1088, %v1090
    %v1100 = vsel %vm578, %v1092, %v1094
    %v1101 = vsel %vm578, %v1096, %v1098
    %v1108 = vadd.f32 %v1081, %v1099
    %v1109 = vadd.f32 %v1082, %v1090
    %v1110 = vadd.f32 %v1083, %v1100
    %v1111 = vadd.f32 %v1084, %v1094
    %v1112 = vadd.f32 %v1085, %v1101
    %v1113 = vadd.f32 %v1086, %v1098
    %v1114 = vmul.f32 %v1108, 0.0186
    %v1115 = vmul.f32 %v1109, 0.0186
    %v1116 = vmul.f32 %v1110, 0.0186
    %v1117 = vmul.f32 %v1111, 0.0186
    %v1118 = vmul.f32 %v1112, 0.0186
    %v1119 = vmul.f32 %v1113, 0.0186
    %v1126 = vrot.slane %v1114, 1
    %v1127 = vrot.slane %v1116, 1
    %v1128 = vsel %vm418, %v1126, %v1127
    %v1129 = vrot.slane %v1115, 1
    %v1130 = vrot.slane %v1117, 1
    %v1131 = vsel %vm418, %v1129, %v1130
    %v1132 = vrot.slane %v1118, 1
    %v1133 = vsel %vm418, %v1127, %v1132
    %v1134 = vrot.slane %v1119, 1
    %v1135 = vsel %vm418, %v1130, %v1134
    %1136 = vrot.lane.b32.xlu0 %v1128, 126
    %v1137 = vpop.permute.xlu0 %1136
    %1138 = vrot.lane.b32.xlu0 %v1131, 126
    %v1139 = vpop.permute.xlu0 %1138
    %1140 = vrot.lane.b32.xlu0 %v1133, 126
    %v1141 = vpop.permute.xlu0 %1140
    %1142 = vrot.lane.b32.xlu0 %v1135, 126
    %v1143 = vpop.permute.xlu0 %1142
    %v1144 = vsel %vm578, %v1137, %v1139
    %v1145 = vsel %vm578, %v1141, %v1143
    %v1150 = vadd.f32 %v935, %v1144
    %v1151 = vadd.f32 %v936, %v1139
    %v1152 = vadd.f32 %v937, %v1145
    %v1153 = vadd.f32 %v938, %v1143
    %v1154 = vrot.slane %v748, 2
    %v1155 = vsel %vm597, %v1154, %v599
    %v1156 = vrot.slane %v749, 2
    %v1157 = vsel %vm597, %v1156, %v602
    %v1158 = vrot.slane %v750, 2
    %v1159 = vsel %vm597, %v599, %v1158
    %v1160 = vrot.slane %v751, 2
    %v1161 = vsel %vm597, %v602, %v1160
    %1162 = vrot.lane.b32.xlu0 %v1155, 2
    %v1163 = vpop.permute.xlu0 %1162
    %1164 = vrot.lane.b32.xlu0 %v1157, 2
    %v1165 = vpop.permute.xlu0 %1164
    %1166 = vrot.lane.b32.xlu0 %v1159, 2
    %v1167 = vpop.permute.xlu0 %1166
    %1168 = vrot.lane.b32.xlu0 %v1161, 2
    %v1169 = vpop.permute.xlu0 %1168
    %1170 = vrot.lane.b32.xlu0 %v1158, 2
    %v1171 = vpop.permute.xlu0 %1170
    %1172 = vrot.lane.b32.xlu0 %v1160, 2
    %v1173 = vpop.permute.xlu0 %1172
    %v1174 = vsel %vm616, %v1163, %v1165
    %v1175 = vsel %vm616, %v1167, %v1169
    %v1176 = vsel %vm616, %v1171, %v1173
    %v1183 = vadd.f32 %v410, %v1163
    %v1184 = vadd.f32 %v411, %v1174
    %v1185 = vadd.f32 %v313, %v1167
    %v1186 = vadd.f32 %v314, %v1175
    %v1187 = vadd.f32 %v412, %v1171
    %v1188 = vadd.f32 %v413, %v1176
    %1189 = vrot.lane.b32.xlu0 %v1155, 126
    %v1190 = vpop.permute.xlu0 %1189
    %1191 = vrot.lane.b32.xlu0 %v1157, 126
    %v1192 = vpop.permute.xlu0 %1191
    %1193 = vrot.lane.b32.xlu0 %v1159, 126
    %v1194 = vpop.permute.xlu0 %1193
    %1195 = vrot.lane.b32.xlu0 %v1161, 126
    %v1196 = vpop.permute.xlu0 %1195
    %1197 = vrot.lane.b32.xlu0 %v1158, 126
    %v1198 = vpop.permute.xlu0 %1197
    %1199 = vrot.lane.b32.xlu0 %v1160, 126
    %v1200 = vpop.permute.xlu0 %1199
    %v1201 = vsel %vm578, %v1190, %v1192
    %v1202 = vsel %vm578, %v1194, %v1196
    %v1203 = vsel %vm578, %v1198, %v1200
    %v1210 = vadd.f32 %v1183, %v1201
    %v1211 = vadd.f32 %v1184, %v1192
    %v1212 = vadd.f32 %v1185, %v1202
    %v1213 = vadd.f32 %v1186, %v1196
    %v1214 = vadd.f32 %v1187, %v1203
    %v1215 = vadd.f32 %v1188, %v1200
    %v1216 = vadd.f32 %v1210, %v853
    %v1217 = vadd.f32 %v1211, %v855
    %v1218 = vadd.f32 %v1212, %v857
    %v1219 = vadd.f32 %v1213, %v859
    %v1220 = vadd.f32 %v1214, %v856
    %v1221 = vadd.f32 %v1215, %v858
    %v1222 = vmul.f32 %v1216, 0.0269
    %v1223 = vmul.f32 %v1217, 0.0269
    %v1224 = vmul.f32 %v1218, 0.0269
    %v1225 = vmul.f32 %v1219, 0.0269
    %v1226 = vmul.f32 %v1220, 0.0269
    %v1227 = vmul.f32 %v1221, 0.0269
    %v1234 = vrot.slane %v1222, 1
    %v1235 = vrot.slane %v1224, 1
    %v1236 = vsel %vm418, %v1234, %v1235
    %v1237 = vrot.slane %v1223, 1
    %v1238 = vrot.slane %v1225, 1
    %v1239 = vsel %vm418, %v1237, %v1238
    %v1240 = vrot.slane %v1226, 1
    %v1241 = vsel %vm418, %v1235, %v1240
    %v1242 = vrot.slane %v1227, 1
    %v1243 = vsel %vm418, %v1238, %v1242
    %1244 = vrot.lane.b32.xlu0 %v1236, 125
    %v1245 = vpop.permute.xlu0 %1244
    %1246 = vrot.lane.b32.xlu0 %v1239, 125
    %v1247 = vpop.permute.xlu0 %1246
    %1248 = vrot.lane.b32.xlu0 %v1241, 125
    %v1249 = vpop.permute.xlu0 %1248
    %1250 = vrot.lane.b32.xlu0 %v1243, 125
    %v1251 = vpop.permute.xlu0 %1250
    %v1252 = vsel %vm793, %v1245, %v1247
    %v1253 = vsel %vm793, %v1249, %v1251
    %v1258 = vadd.f32 %v1150, %v1252
    %v1259 = vadd.f32 %v1151, %v1247
    %v1260 = vadd.f32 %v1152, %v1253
    %v1261 = vadd.f32 %v1153, %v1251
    %1262 = vrot.lane.b32.xlu0 %v589, 126
    %v1263 = vpop.permute.xlu0 %1262
    %1264 = vrot.lane.b32.xlu0 %v590, 126
    %v1265 = vpop.permute.xlu0 %1264
    %1266 = vrot.lane.b32.xlu0 %v591, 126
    %v1267 = vpop.permute.xlu0 %1266
    %1268 = vrot.lane.b32.xlu0 %v592, 126
    %v1269 = vpop.permute.xlu0 %1268
    %v1270 = vsel %vm578, %v1263, %v1265
    %v1271 = vsel %vm578, %v1267, %v1269
    %v1276 = vadd.f32 %v589, %v1270
    %v1277 = vadd.f32 %v590, %v1265
    %v1278 = vadd.f32 %v591, %v1271
    %v1279 = vadd.f32 %v592, %v1269
    %v1280 = vrot.slane %v645, 2
    %v1281 = vsel %vm597, %v1280, %v599
    %v1282 = vrot.slane %v646, 2
    %v1283 = vsel %vm597, %v1282, %v602
    %v1284 = vrot.slane %v647, 2
    %v1285 = vsel %vm597, %v599, %v1284
    %v1286 = vrot.slane %v648, 2
    %v1287 = vsel %vm597, %v602, %v1286
    %v1294 = vadd.f32 %v1276, %v1281
    %v1295 = vadd.f32 %v1277, %v1283
    %v1296 = vadd.f32 %v587, %v1285
    %v1297 = vadd.f32 %v588, %v1287
    %v1298 = vadd.f32 %v1278, %v1284
    %v1299 = vadd.f32 %v1279, %v1286
    %1300 = vrot.lane.b32.xlu0 %v1281, 126
    %v1301 = vpop.permute.xlu0 %1300
    %1302 = vrot.lane.b32.xlu0 %v1283, 126
    %v1303 = vpop.permute.xlu0 %1302
    %1304 = vrot.lane.b32.xlu0 %v1285, 126
    %v1305 = vpop.permute.xlu0 %1304
    %1306 = vrot.lane.b32.xlu0 %v1287, 126
    %v1307 = vpop.permute.xlu0 %1306
    %1308 = vrot.lane.b32.xlu0 %v1284, 126
    %v1309 = vpop.permute.xlu0 %1308
    %1310 = vrot.lane.b32.xlu0 %v1286, 126
    %v1311 = vpop.permute.xlu0 %1310
    %v1312 = vsel %vm578, %v1301, %v1303
    %v1313 = vsel %vm578, %v1305, %v1307
    %v1314 = vsel %vm578, %v1309, %v1311
    %v1321 = vadd.f32 %v1294, %v1312
    %v1322 = vadd.f32 %v1295, %v1303
    %v1323 = vadd.f32 %v1296, %v1313
    %v1324 = vadd.f32 %v1297, %v1307
    %v1325 = vadd.f32 %v1298, %v1314
    %v1326 = vadd.f32 %v1299, %v1311
    %v1327 = vmul.f32 %v1321, 0.0561
    %v1328 = vmul.f32 %v1322, 0.0561
    %v1329 = vmul.f32 %v1323, 0.0561
    %v1330 = vmul.f32 %v1324, 0.0561
    %v1331 = vmul.f32 %v1325, 0.0561
    %v1332 = vmul.f32 %v1326, 0.0561
    %v1339 = vrot.slane %v1327, 2
    %v1340 = vrot.slane %v1329, 2
    %v1341 = vsel %vm597, %v1339, %v1340
    %v1342 = vrot.slane %v1328, 2
    %v1343 = vrot.slane %v1330, 2
    %v1344 = vsel %vm597, %v1342, %v1343
    %v1345 = vrot.slane %v1331, 2
    %v1346 = vsel %vm597, %v1340, %v1345
    %v1347 = vrot.slane %v1332, 2
    %v1348 = vsel %vm597, %v1343, %v1347
    %1349 = vrot.lane.b32.xlu0 %v1341, 126
    %v1350 = vpop.permute.xlu0 %1349
    %1351 = vrot.lane.b32.xlu0 %v1344, 126
    %v1352 = vpop.permute.xlu0 %1351
    %1353 = vrot.lane.b32.xlu0 %v1346, 126
    %v1354 = vpop.permute.xlu0 %1353
    %1355 = vrot.lane.b32.xlu0 %v1348, 126
    %v1356 = vpop.permute.xlu0 %1355
    %v1357 = vsel %vm578, %v1350, %v1352
    %v1358 = vsel %vm578, %v1354, %v1356
    %v1363 = vadd.f32 %v1258, %v1357
    %v1364 = vadd.f32 %v1259, %v1352
    %v1365 = vadd.f32 %v1260, %v1358
    %v1366 = vadd.f32 %v1261, %v1356
    %v1367 = vrot.slane %v748, 1
    %v1368 = vsel %vm418, %v1367, %v420
    %v1369 = vrot.slane %v749, 1
    %v1370 = vsel %vm418, %v1369, %v423
    %v1371 = vrot.slane %v750, 1
    %v1372 = vsel %vm418, %v420, %v1371
    %v1373 = vrot.slane %v751, 1
    %v1374 = vsel %vm418, %v423, %v1373
    %1375 = vrot.lane.b32.xlu0 %v1368, 1
    %v1376 = vpop.permute.xlu0 %1375
    %1377 = vrot.lane.b32.xlu0 %v1370, 1
    %v1378 = vpop.permute.xlu0 %1377
    %1379 = vrot.lane.b32.xlu0 %v1372, 1
    %v1380 = vpop.permute.xlu0 %1379
    %1381 = vrot.lane.b32.xlu0 %v1374, 1
    %v1382 = vpop.permute.xlu0 %1381
    %1383 = vrot.lane.b32.xlu0 %v1371, 1
    %v1384 = vpop.permute.xlu0 %1383
    %1385 = vrot.lane.b32.xlu0 %v1373, 1
    %v1386 = vpop.permute.xlu0 %1385
    %v1387 = vsel %vm437, %v1376, %v1378
    %v1388 = vsel %vm437, %v1380, %v1382
    %v1389 = vsel %vm437, %v1384, %v1386
    %v1396 = vadd.f32 %v589, %v1376
    %v1397 = vadd.f32 %v590, %v1387
    %v1398 = vadd.f32 %v313, %v1380
    %v1399 = vadd.f32 %v314, %v1388
    %v1400 = vadd.f32 %v591, %v1384
    %v1401 = vadd.f32 %v592, %v1389
    %1402 = vrot.lane.b32.xlu0 %v1368, 127
    %v1403 = vpop.permute.xlu0 %1402
    %1404 = vrot.lane.b32.xlu0 %v1370, 127
    %v1405 = vpop.permute.xlu0 %1404
    %1406 = vrot.lane.b32.xlu0 %v1372, 127
    %v1407 = vpop.permute.xlu0 %1406
    %1408 = vrot.lane.b32.xlu0 %v1374, 127
    %v1409 = vpop.permute.xlu0 %1408
    %1410 = vrot.lane.b32.xlu0 %v1371, 127
    %v1411 = vpop.permute.xlu0 %1410
    %1412 = vrot.lane.b32.xlu0 %v1373, 127
    %v1413 = vpop.permute.xlu0 %1412
    %v1414 = vsel %vm559, %v1403, %v1405
    %v1415 = vsel %vm559, %v1407, %v1409
    %v1416 = vsel %vm559, %v1411, %v1413
    %v1423 = vadd.f32 %v1396, %v1414
    %v1424 = vadd.f32 %v1397, %v1405
    %v1425 = vadd.f32 %v1398, %v1415
    %v1426 = vadd.f32 %v1399, %v1409
    %v1427 = vadd.f32 %v1400, %v1416
    %v1428 = vadd.f32 %v1401, %v1413
    %v1429 = vadd.f32 %v1423, %v1281
    %v1430 = vadd.f32 %v1424, %v1283
    %v1431 = vadd.f32 %v1425, %v1285
    %v1432 = vadd.f32 %v1426, %v1287
    %v1433 = vadd.f32 %v1427, %v1284
    %v1434 = vadd.f32 %v1428, %v1286
    %v1435 = vmul.f32 %v1429, 0.081
    %v1436 = vmul.f32 %v1430, 0.081
    %v1437 = vmul.f32 %v1431, 0.081
    %v1438 = vmul.f32 %v1432, 0.081
    %v1439 = vmul.f32 %v1433, 0.081
    %v1440 = vmul.f32 %v1434, 0.081
    %v1447 = vrot.slane %v1435, 2
    %v1448 = vrot.slane %v1437, 2
    %v1449 = vsel %vm597, %v1447, %v1448
    %v1450 = vrot.slane %v1436, 2
    %v1451 = vrot.slane %v1438, 2
    %v1452 = vsel %vm597, %v1450, %v1451
    %v1453 = vrot.slane %v1439, 2
    %v1454 = vsel %vm597, %v1448, %v1453
    %v1455 = vrot.slane %v1440, 2
    %v1456 = vsel %vm597, %v1451, %v1455
    %1457 = vrot.lane.b32.xlu0 %v1449, 125
    %v1458 = vpop.permute.xlu0 %1457
    %1459 = vrot.lane.b32.xlu0 %v1452, 125
    %v1460 = vpop.permute.xlu0 %1459
    %1461 = vrot.lane.b32.xlu0 %v1454, 125
    %v1462 = vpop.permute.xlu0 %1461
    %1463 = vrot.lane.b32.xlu0 %v1456, 125
    %v1464 = vpop.permute.xlu0 %1463
    %v1465 = vsel %vm793, %v1458, %v1460
    %v1466 = vsel %vm793, %v1462, %v1464
    %v1471 = vadd.f32 %v1363, %v1465
    %v1472 = vadd.f32 %v1364, %v1460
    %v1473 = vadd.f32 %v1365, %v1466
    %v1474 = vadd.f32 %v1366, %v1464
    %v1475 = vmul.f32 %v748, 0.1169
    %v1476 = vmul.f32 %v749, 0.1169
    %v1477 = vmul.f32 %v313, 0.1169
    %v1478 = vmul.f32 %v314, 0.1169
    %v1479 = vmul.f32 %v750, 0.1169
    %v1480 = vmul.f32 %v751, 0.1169
    %v1487 = vrot.slane %v1475, 3
    %v1488 = vrot.slane %v1477, 3
    %v1489 = vsel %vm756, %v1487, %v1488
    %v1490 = vrot.slane %v1476, 3
    %v1491 = vrot.slane %v1478, 3
    %v1492 = vsel %vm756, %v1490, %v1491
    %v1493 = vrot.slane %v1479, 3
    %v1494 = vsel %vm756, %v1488, %v1493
    %v1495 = vrot.slane %v1480, 3
    %v1496 = vsel %vm756, %v1491, %v1495
    %1497 = vrot.lane.b32.xlu0 %v1489, 125
    %v1498 = vpop.permute.xlu0 %1497
    %1499 = vrot.lane.b32.xlu0 %v1492, 125
    %v1500 = vpop.permute.xlu0 %1499
    %1501 = vrot.lane.b32.xlu0 %v1494, 125
    %v1502 = vpop.permute.xlu0 %1501
    %1503 = vrot.lane.b32.xlu0 %v1496, 125
    %v1504 = vpop.permute.xlu0 %1503
    %v1505 = vsel %vm793, %v1498, %v1500
    %v1506 = vsel %vm793, %v1502, %v1504
    %v1511 = vadd.f32 %v1471, %v1505
    %v1512 = vadd.f32 %v1472, %v1500
    %v1513 = vadd.f32 %v1473, %v1506
    %v1514 = vadd.f32 %v1474, %v1504
    %1517 = vrot.lane.b32.xlu0 %v1511, 122
    %v1518 = vpop.permute.xlu0 %1517
    %1519 = vrot.lane.b32.xlu0 %v1513, 122
    %v1520 = vpop.permute.xlu0 %1519
    %1523 = vrot.lane.b32.xlu0 %v1511, 116
    %v1524 = vpop.permute.xlu0 %1523
    %1525 = vrot.lane.b32.xlu0 %v1513, 116
    %v1526 = vpop.permute.xlu0 %1525
    %1529 = vrot.lane.b32.xlu0 %v1511, 110
    %v1530 = vpop.permute.xlu0 %1529
    %1531 = vrot.lane.b32.xlu0 %v1513, 110
    %v1532 = vpop.permute.xlu0 %1531
    %1535 = vrot.lane.b32.xlu0 %v1511, 104
    %v1536 = vpop.permute.xlu0 %1535
    %1537 = vrot.lane.b32.xlu0 %v1513, 104
    %v1538 = vpop.permute.xlu0 %1537
    %1541 = vrot.lane.b32.xlu0 %v1511, 98
    %v1542 = vpop.permute.xlu0 %1541
    %1543 = vrot.lane.b32.xlu0 %v1513, 98
    %v1544 = vpop.permute.xlu0 %1543
    %1549 = vrot.lane.b32.xlu0 %v1512, 92
    %v1550 = vpop.permute.xlu0 %1549
    %1551 = vrot.lane.b32.xlu0 %v1514, 92
    %v1552 = vpop.permute.xlu0 %1551
    %1555 = vrot.lane.b32.xlu0 %v1512, 86
    %v1556 = vpop.permute.xlu0 %1555
    %1557 = vrot.lane.b32.xlu0 %v1514, 86
    %v1558 = vpop.permute.xlu0 %1557
    %vm1561 = vcmask 130048
    %v1562 = vsel %vm1561, %v1511, %v1518
    %v1563 = vsel %vm1561, %v1513, %v1520
    %vm1564 = vcmask 261120
    %v1565 = vsel %vm1564, %v1562, %v1524
    %v1566 = vsel %vm1564, %v1563, %v1526
    %vm1567 = vcmask 392192
    %v1568 = vsel %vm1567, %v1565, %v1530
    %v1569 = vsel %vm1567, %v1566, %v1532
    %vm1570 = vcmask 523264
    %v1571 = vsel %vm1570, %v1568, %v1536
    %v1572 = vsel %vm1570, %v1569, %v1538
    %vm1573 = vcmask 654336
    %v1574 = vsel %vm1573, %v1571, %v1542
    %v1575 = vsel %vm1573, %v1572, %v1544
    %vm1576 = vcmask 785408
    %v1577 = vsel %vm1576, %v1574, %v1550
    %v1578 = vsel %vm1576, %v1575, %v1552
    %vm1579 = vcmask 916480
    %v1580 = vsel %vm1579, %v1577, %v1556
    %v1581 = vsel %vm1579, %v1578, %v1558
    %1582 = vst [vmem:[#allocation6] sm:$0xff] %v1580
    %1583 = vst [vmem:[#allocation6 + $0x8] sm:$0xff] %v1581
    // Predicated region
    $region10: #{tpu_custom_call.1} parent=1 // pred_check
      _
    $region11: #{tpu_custom_call.1} parent=1 // pred_check_branch
      %1585 = sbr.rel (0) target = $region13
    $region12: #{tpu_custom_call.1} parent=1 // pred_region
      %s1587 = ssub.s32 256, 256
      %1588 = vsyncadd [#allocation5], %s1587
      %s1589 = sshll.u32 [#allocation6], 4
      %s1590 = int_to_ptr.vmem [resolvable:$true] %s1589
      %1595 = dma.vmem_to_hbm [thread:$0]  %s1590, 256, %s1, [#allocation5], 128, 128, 8
    $region13: #{tpu_custom_call.1} parent=1 // pred_fallthru
      _
    // Predicated region
    $region14: #{tpu_custom_call.1} parent=1 // pred_check
      _
    $region15: #{tpu_custom_call.1} parent=1 // pred_check_branch
      %1597 = sbr.rel (0) target = $region17
    $region16: #{tpu_custom_call.1} parent=1 // pred_region
      %1598 = dma.done [#allocation5], 256
    $region17: #{tpu_custom_call.1} parent=1 // pred_fallthru
      _
    %1599 = vsyncpa [#allocation4], 1
    %1600 = vsyncpa [#allocation5], 1

</llo_original>
